<compile_context>
chip_gen: v5e
topology: v5e:2x2
jax: 0.10.0
libtpu: 0.0.40
codegen_flags: <defaults>
</compile_context>

<pallas_src>
import functools

import jax
import jax.numpy as jnp
from jax.experimental import pallas as pl
from jax.experimental.pallas import tpu as pltpu

LN_EPS = 1e-5
BN_EPS = 1e-5


def _round_up(x, m):
    return (x + m - 1) // m * m


def _cdiv(a, b):
    return (a + b - 1) // b


def _chip_config():
    """Returns (feature_align, dw_bf16, vmem_capacity_bytes) for the local TPU."""
    kind = ""
    try:
        kind = jax.devices()[0].device_kind.lower()
    except Exception:
        pass
    modern = any(s in kind for s in ("v6", "v7", "7x"))   # 256x256 MXU, bf16 VPU
    feature_align = 256 if modern else 128
    dw_bf16 = modern                                      # bf16 taps only where VPU has bf16
    try:
        vmem_cap = int(pltpu.get_tpu_info().vmem_capacity_bytes)
    except Exception:
        vmem_cap = (64 if ("7x" in kind or "v7" in kind) else 128) * 1024 * 1024
    return feature_align, dw_bf16, vmem_cap


def _const_bytes(d_pad, c_pad, kk):
    # Weight / vector blocks, counted double-buffered (conservative).
    return 2 * (d_pad * 2 * c_pad * 2            # fused GLU W (bf16)
                + c_pad * d_pad * 2              # output projection W (bf16)
                + kk * c_pad * 4                 # depthwise W (f32)
                + 4 * (3 * d_pad + 2 * 2 * c_pad + 4 * c_pad))


def _tile_footprint(tt, halo, d_pad, c_pad, xbytes):
    """Rough per-step VMEM bytes for a TT-row tile (pipeline bufs + temporaries)."""
    w = tt + 2 * halo
    io = 2 * w * d_pad * xbytes + 2 * tt * d_pad * xbytes             # dbl-buffered in/out
    tmp = 4 * (2 * w * d_pad + 3 * w * c_pad + tt * c_pad + tt * d_pad)  # xn,p,g,acc,out (f32)
    return int(1.25 * (io + tmp))


def _choose_seq_tile(T, seq_tile, halo, d_pad, c_pad, kk, xbytes, budget):
    """Largest sublane-aligned tile (>= halo) whose footprint fits the VMEM budget."""
    t8 = _round_up(T, 8)
    hi = t8 if seq_tile is None else min(t8, _round_up(seq_tile, 8))
    hi = max(hi, halo, 8)
    cands = sorted({c for c in (2048, 1536, 1024, 768, 512, 384, 256, 192, 128,
                                64, 32, 16, 8) if halo <= c <= hi} | {hi},
                   reverse=True)
    wbytes = _const_bytes(d_pad, c_pad, kk)
    for tt in cands:
        if _tile_footprint(tt, halo, d_pad, c_pad, xbytes) + wbytes <= budget:
            return tt
    return cands[-1]


def _conv_module_kernel(x_ref,
                        ln_g_ref, ln_b_ref,
                        wab_ref, bab_ref,
                        wd_ref, bd_ref,
                        bns_ref, bnb_ref,
                        w2_ref, b2_ref,
                        o_ref,
                        *, seq_len, true_d, c_pad, seq_tile, halo, kk, pad, dw_bf16):
    t = pl.program_id(1)
    tt = seq_tile
    w = tt + 2 * halo            # rows in the haloed window (multiple of 8)
    off = halo - pad             # window row of the first depthwise tap

    # ---- haloed x window: single DMA -> (W, D_pad) -------------------------
    xw = x_ref[0, 0].astype(jnp.float32)

    # ---- LayerNorm over the true D, two-pass (x - mu) form -----------------
    inv_d = 1.0 / true_d
    col_ok = jax.lax.broadcasted_iota(jnp.int32, (1, xw.shape[1]), 1) < true_d
    mu = jnp.sum(xw, axis=-1, keepdims=True) * inv_d
    xc = jnp.where(col_ok, xw - mu, 0.0)       # padded feature columns stay 0
    var = jnp.sum(xc * xc, axis=-1, keepdims=True) * inv_d
    xn = xc * jax.lax.rsqrt(var + LN_EPS)
    xn = xn * ln_g_ref[...] + ln_b_ref[...]                      # (W, D_pad)

    # ---- fused pointwise Conv1d(D -> 2C) + GLU: one bf16 MXU pass ----------
    p = jnp.dot(xn.astype(jnp.bfloat16), wab_ref[...],
                preferred_element_type=jnp.float32) + bab_ref[...]
    a = p[:, :c_pad]             # lane-aligned split (C_pad % 128 == 0)
    b = p[:, c_pad:]
    g = a * jax.nn.sigmoid(b)                                    # (W, C_pad)

    # Zero rows outside the true sequence (SAME zero padding + T padding).
    row = t * tt - halo + jax.lax.broadcasted_iota(jnp.int32, (w, 1), 0)
    g = jnp.where(jnp.logical_and(row >= 0, row < seq_len), g, 0.0)

    # ---- depthwise Conv1d along T: chained sublane roll-by-1 (XLU) ---------
    # bf16 taps (v6e/v7x) halve XLU/VPU work; accumulation stays f32.
    tap_dtype = jnp.bfloat16 if dw_bf16 else jnp.float32
    cur = g.astype(tap_dtype)
    if off:
        cur = pltpu.roll(cur, shift=w - off, axis=0)   # cur[i] = g[i + off]
    wd = wd_ref[...].astype(tap_dtype)                 # (K, C_pad), hoisted
    acc = jnp.zeros((tt, c_pad), jnp.float32)
    for k in range(kk):          # static K-tap unroll; one live rolled buffer
        if k:
            cur = pltpu.roll(cur, shift=w - 1, axis=0)  # cur[i] = g[i + off + k]
        acc = acc + cur[:tt, :] * wd[k:k + 1, :]
    conv = acc + bd_ref[...]                                     # (TT, C_pad)

    # ---- BatchNorm1d (eval mode, folded) + SiLU -----------------------------
    y = conv * bns_ref[...] + bnb_ref[...]
    y = y * jax.nn.sigmoid(y)

    # ---- pointwise Conv1d(C -> D): bf16 MXU pass ----------------------------
    out = jnp.dot(y.astype(jnp.bfloat16), w2_ref[...],
                  preferred_element_type=jnp.float32) + b2_ref[...]

    # Dropout: identity in eval mode.
    o_ref[0] = out.astype(o_ref.dtype)


def convolution_module(x, params, *, seq_tile=None):
    """x: (B, T, D).  params: PyTorch-layout weights (see __main__).

    Returns (B, T, D), matching ConvolutionModule.forward in eval mode.
    """
    B, T, D = x.shape
    two_c, d_w = params["pw1_w"].shape
    assert d_w == D
    C = two_c // 2
    c_dw, K = params["dw_w"].shape
    assert c_dw == C
    assert K % 2 == 1, "depthwise kernel size must be odd for SAME padding"
    pad = (K - 1) // 2

    f32 = jnp.float32
    feat_align, dw_bf16_default, vmem_cap = _chip_config()
    D_pad = _round_up(D, feat_align)          # lane- & MXU-aligned feature dims
    C_pad = _round_up(C, feat_align)
    HALO = _round_up(max(pad, 1), 8)          # halo rows, sublane-aligned

    xbytes = jnp.dtype(x.dtype).itemsize
    vmem_budget = min(int(0.75 * vmem_cap), vmem_cap - 8 * 1024 * 1024)
    TT = _choose_seq_tile(T, seq_tile, HALO, D_pad, C_pad, K, xbytes, vmem_budget)
    # Megacore occupancy: guarantee >= 2 grid points when the shapes allow it.
    if B * _cdiv(T, TT) < 2:
        tt2 = _round_up(_cdiv(T, 2), 8)
        if HALO <= tt2 < TT:
            TT = tt2
    nT = _cdiv(T, TT)
    T_pad = nT * TT
    W = TT + 2 * HALO

    # ---- one haloed window per tile, from reshape views + one concatenate ---
    xp = jnp.pad(x, ((0, 0), (0, T_pad - T), (0, D_pad - D)))    # (B, T_pad, Dp)
    xh = jnp.pad(xp, ((0, 0), (HALO, HALO), (0, 0)))             # (B, T_pad+2H, Dp)
    lh = xh[:, :T_pad, :].reshape(B, nT, TT, D_pad)[:, :, :HALO, :]
    ct = xp.reshape(B, nT, TT, D_pad)
    rh = xh[:, TT + HALO:, :]                                    # ((nT-1)*TT+H, rows)
    rh = jnp.pad(rh, ((0, 0), (0, T_pad - rh.shape[1]), (0, 0)))
    rh = rh.reshape(B, nT, TT, D_pad)[:, :, :HALO, :]
    xw = jnp.concatenate([lh, ct, rh], axis=2)                   # (B, nT, W, Dp)

    def pad_row(v, cols):
        v = jnp.asarray(v, f32).reshape(1, -1)
        return jnp.pad(v, ((0, 0), (0, cols - v.shape[1])))

    # LayerNorm affine.
    ln_g = pad_row(params["ln_g"], D_pad)
    ln_b = pad_row(params["ln_b"], D_pad)

    # Fused GLU projection weight (D_pad, 2*C_pad): a-half at lanes [0, C_pad),
    # gate-half at lanes [C_pad, 2*C_pad).  Stored bf16 (MXU native).
    w1 = jnp.asarray(params["pw1_w"], f32)                       # (2C, D)
    wab = jnp.zeros((D_pad, 2 * C_pad), f32)
    wab = wab.at[:D, :C].set(w1[:C].T).at[:D, C_pad:C_pad + C].set(w1[C:].T)
    wab = wab.astype(jnp.bfloat16)
    b1 = jnp.asarray(params["pw1_b"], f32)
    bab = jnp.zeros((1, 2 * C_pad), f32)
    bab = bab.at[0, :C].set(b1[:C]).at[0, C_pad:C_pad + C].set(b1[C:])

    # Depthwise conv weight (K, C_pad) + bias.
    wd = jnp.zeros((K, C_pad), f32).at[:, :C].set(
        jnp.asarray(params["dw_w"], f32).T)
    bd = pad_row(params["dw_b"], C_pad)

    # BatchNorm1d running stats folded to per-channel scale / shift (eval).
    scale = params["bn_gamma"] / jnp.sqrt(params["bn_var"] + BN_EPS)
    shift = params["bn_beta"] - params["bn_mean"] * scale
    bns = pad_row(scale, C_pad)
    bnb = pad_row(shift, C_pad)

    # Output projection (bf16) + bias.
    w2 = jnp.zeros((C_pad, D_pad), f32).at[:C, :D].set(
        jnp.asarray(params["pw2_w"], f32).T).astype(jnp.bfloat16)
    b2 = pad_row(params["pw2_b"], D_pad)

    def const_spec(shape, single_buffer):
        n = len(shape)
        idx = lambda b, t, _n=n: (0,) * _n
        if single_buffer:
            try:
                # Constant-index weight blocks only need one VMEM buffer.
                return pl.BlockSpec(shape, idx, pipeline_mode=pl.Buffered(1))
            except (TypeError, AttributeError):
                pass
        return pl.BlockSpec(shape, idx)

    def run(single_buffer, use_bf16_taps):
        kernel = functools.partial(
            _conv_module_kernel,
            seq_len=T, true_d=D, c_pad=C_pad, seq_tile=TT,
            halo=HALO, kk=K, pad=pad, dw_bf16=use_bf16_taps)
        grid_spec = pltpu.PrefetchScalarGridSpec(
            num_scalar_prefetch=0,
            grid=(B, nT),
            in_specs=[
                pl.BlockSpec((1, 1, W, D_pad), lambda b, t: (b, t, 0, 0)),  # x window
                const_spec((1, D_pad), single_buffer),           # LN gamma
                const_spec((1, D_pad), single_buffer),           # LN beta
                const_spec((D_pad, 2 * C_pad), single_buffer),   # fused GLU W
                const_spec((1, 2 * C_pad), single_buffer),       # fused GLU b
                const_spec((K, C_pad), single_buffer),           # depthwise W
                const_spec((1, C_pad), single_buffer),           # depthwise b
                const_spec((1, C_pad), single_buffer),           # BN scale
                const_spec((1, C_pad), single_buffer),           # BN shift
                const_spec((C_pad, D_pad), single_buffer),       # W2
                const_spec((1, D_pad), single_buffer),           # b2
            ],
            out_specs=pl.BlockSpec((1, TT, D_pad), lambda b, t: (b, t, 0)),
        )
        out = pl.pallas_call(
            kernel,
            out_shape=jax.ShapeDtypeStruct((B, T_pad, D_pad), x.dtype),
            grid_spec=grid_spec,
            compiler_params=pltpu.CompilerParams(
                dimension_semantics=("parallel", "parallel"),
                vmem_limit_bytes=int(vmem_budget)),
        )(xw, ln_g, ln_b, wab, bab, wd, bd, bns, bnb, w2, b2)
        return jax.block_until_ready(out)

    # Preferred config first; fall back if this JAX/Mosaic version rejects
    # Buffered(1) single-buffering or bf16 sublane rolls.
    configs = []
    for sb in (True, False):
        for bf in ((True, False) if dw_bf16_default else (False,)):
            configs.append((sb, bf))
    out, last_err = None, None
    for sb, bf in configs:
        try:
            out = run(sb, bf)
            break
        except Exception as e:    # retry with a safer configuration
            last_err = e
    if out is None:
        raise last_err

    return out[:, :T, :D]


def reference(x, params):
    """Pure-JAX reference mirroring the PyTorch forward (eval mode), with bf16
    matmul operands to match the kernel's MXU precision."""
    f32 = jnp.float32
    B, T, D = x.shape
    C = params["pw1_w"].shape[0] // 2
    K = params["dw_w"].shape[1]
    pad = (K - 1) // 2

    def bdot(a, w):  # bf16 operands, f32 accumulate (as in the kernel)
        return jnp.dot(a.astype(jnp.bfloat16).astype(f32),
                       w.astype(jnp.bfloat16).astype(f32))

    mu = jnp.mean(x, axis=-1, keepdims=True)
    var = jnp.mean((x - mu) ** 2, axis=-1, keepdims=True)
    xn = (x - mu) / jnp.sqrt(var + LN_EPS) * params["ln_g"] + params["ln_b"]

    h = bdot(xn, params["pw1_w"].T) + params["pw1_b"]
    a, b = h[..., :C], h[..., C:]
    g = a * jax.nn.sigmoid(b)                                    # (B, T, C)

    gp = jnp.pad(g, ((0, 0), (pad, pad), (0, 0)))
    acc = sum(gp[:, k:k + T, :] * params["dw_w"][:, k][None, None, :]
              for k in range(K)) + params["dw_b"]

    scale = params["bn_gamma"] / jnp.sqrt(params["bn_var"] + BN_EPS)
    shift = params["bn_beta"] - params["bn_mean"] * scale
    y = acc * scale + shift
    y = y * jax.nn.sigmoid(y)
    return bdot(y, params["pw2_w"].T) + params["pw2_b"]


if __name__ == "__main__":
    key = jax.random.PRNGKey(0)

    def rnd(k, shape, scale=0.1):
        return scale * jax.random.normal(k, shape, dtype=jnp.float32)

    def make_params(k, D, C, K):
        ks = jax.random.split(k, 12)
        return {
            "ln_g": 1.0 + rnd(ks[0], (D,)),
            "ln_b": rnd(ks[1], (D,)),
            "pw1_w": rnd(ks[2], (2 * C, D)),     # Conv1d(D, 2C, 1).weight squeezed
            "pw1_b": rnd(ks[3], (2 * C,)),
            "dw_w": rnd(ks[4], (C, K)),          # depthwise Conv1d weight squeezed
            "dw_b": rnd(ks[5], (C,)),
            "bn_gamma": 1.0 + rnd(ks[6], (C,)),
            "bn_beta": rnd(ks[7], (C,)),
            "bn_mean": rnd(ks[8], (C,)),
            "bn_var": 0.5 + jnp.abs(rnd(ks[9], (C,))),
            "pw2_w": rnd(ks[10], (D, C)),        # Conv1d(C, D, 1).weight squeezed
            "pw2_b": rnd(ks[11], (D,)),
        }

    # Case 0: single-tile path.  Case 1: nT > 1 (multi-tile halo exchange),
    # T not divisible by the tile, and a larger depthwise kernel (K=15).
    cases = [
        (2, 16, 32, 16, 7, None),
        (1, 40, 48, 24, 15, 16),
    ]
    kp, kx = jax.random.split(key)
    for i, (B, T, D, C, K, st) in enumerate(cases):
        params = make_params(jax.random.fold_in(kp, i), D, C, K)
        x = rnd(jax.random.fold_in(kx, i), (B, T, D), scale=1.0)

        out = jax.block_until_ready(convolution_module(x, params, seq_tile=st))
        assert out.shape == (B, T, D)

        ref = reference(x, params)
        err = float(jnp.max(jnp.abs(out - ref)))
        assert jnp.allclose(out, ref, atol=2e-2, rtol=2e-2), (
            f"case {i}: mismatch, max err={err}")

    print("KERNEL_OK")
</pallas_src>

<mosaic_0001>
module attributes {stable_mosaic.version = 11 : i64} {
  func.func @_conv_module_kernel(%arg0: i32, %arg1: i32, %arg2: memref<1x1x32x128xf32, #tpu.memory_space<vmem>>, %arg3: memref<1x128xf32, #tpu.memory_space<vmem>>, %arg4: memref<1x128xf32, #tpu.memory_space<vmem>>, %arg5: memref<128x256xbf16, #tpu.memory_space<vmem>>, %arg6: memref<1x256xf32, #tpu.memory_space<vmem>>, %arg7: memref<7x128xf32, #tpu.memory_space<vmem>>, %arg8: memref<1x128xf32, #tpu.memory_space<vmem>>, %arg9: memref<1x128xf32, #tpu.memory_space<vmem>>, %arg10: memref<1x128xf32, #tpu.memory_space<vmem>>, %arg11: memref<128x128xbf16, #tpu.memory_space<vmem>>, %arg12: memref<1x128xf32, #tpu.memory_space<vmem>>, %arg13: memref<1x16x128xf32, #tpu.memory_space<vmem>>) attributes {dimension_semantics = [#tpu.dimension_semantics<parallel>, #tpu.dimension_semantics<parallel>], iteration_bounds = array<i64: 2, 1>, scalar_prefetch = 0 : i64, scratch_operands = 0 : i64, tpu.core_type = #tpu.core_type<tc>, window_params = [{transform_indices = @transform_0, window_bounds = array<i64: 1, 1, 32, 128>}, {pipeline_mode = #tpu.pipeline_mode<synchronous>, transform_indices = @transform_1, window_bounds = array<i64: 1, 128>}, {pipeline_mode = #tpu.pipeline_mode<synchronous>, transform_indices = @transform_2, window_bounds = array<i64: 1, 128>}, {pipeline_mode = #tpu.pipeline_mode<synchronous>, transform_indices = @transform_3, window_bounds = array<i64: 128, 256>}, {pipeline_mode = #tpu.pipeline_mode<synchronous>, transform_indices = @transform_4, window_bounds = array<i64: 1, 256>}, {pipeline_mode = #tpu.pipeline_mode<synchronous>, transform_indices = @transform_5, window_bounds = array<i64: 7, 128>}, {pipeline_mode = #tpu.pipeline_mode<synchronous>, transform_indices = @transform_6, window_bounds = array<i64: 1, 128>}, {pipeline_mode = #tpu.pipeline_mode<synchronous>, transform_indices = @transform_7, window_bounds = array<i64: 1, 128>}, {pipeline_mode = #tpu.pipeline_mode<synchronous>, transform_indices = @transform_8, window_bounds = array<i64: 1, 128>}, {pipeline_mode = #tpu.pipeline_mode<synchronous>, transform_indices = @transform_9, window_bounds = array<i64: 128, 128>}, {pipeline_mode = #tpu.pipeline_mode<synchronous>, transform_indices = @transform_10, window_bounds = array<i64: 1, 128>}, {transform_indices = @transform_11, window_bounds = array<i64: 1, 16, 128>}]} {
    %c0 = arith.constant 0 : index
    %c0_0 = arith.constant 0 : index
    %c0_1 = arith.constant 0 : index
    %c0_2 = arith.constant 0 : index
    %0 = vector.load %arg2[%c0, %c0_0, %c0_1, %c0_2] : memref<1x1x32x128xf32, #tpu.memory_space<vmem>>, vector<1x1x32x128xf32>
    %1 = vector.shape_cast %0 : vector<1x1x32x128xf32> to vector<32x128xf32>
    %2 = tpu.iota {dimensions = array<i32: 1>} : vector<1x128xi32>
    %c32_i32 = arith.constant 32 : i32
    %3 = vector.broadcast %c32_i32 : i32 to vector<1x128xi32>
    %4 = arith.cmpi slt, %2, %3 : vector<1x128xi32>
    %cst = arith.constant dense<0.000000e+00> : vector<32xf32>
    %5 = vector.multi_reduction <add>, %1, %cst [1] : vector<32x128xf32> to vector<32xf32>
    %6 = vector.shape_cast %5 : vector<32xf32> to vector<32x1xf32>
    %cst_3 = arith.constant 3.125000e-02 : f32
    %7 = vector.broadcast %cst_3 : f32 to vector<32x1xf32>
    %8 = arith.mulf %6, %7 : vector<32x1xf32>
    %9 = vector.broadcast %8 : vector<32x1xf32> to vector<32x128xf32>
    %10 = arith.subf %1, %9 : vector<32x128xf32>
    %cst_4 = arith.constant 0.000000e+00 : f32
    %11 = vector.shape_cast %4 : vector<1x128xi1> to vector<1x128xi1>
    %12 = vector.broadcast %11 : vector<1x128xi1> to vector<32x128xi1>
    %13 = vector.broadcast %cst_4 : f32 to vector<32x128xf32>
    %14 = arith.select %12, %10, %13 : vector<32x128xi1>, vector<32x128xf32>
    %15 = arith.mulf %14, %14 : vector<32x128xf32>
    %cst_5 = arith.constant dense<0.000000e+00> : vector<32xf32>
    %16 = vector.multi_reduction <add>, %15, %cst_5 [1] : vector<32x128xf32> to vector<32xf32>
    %17 = vector.shape_cast %16 : vector<32xf32> to vector<32x1xf32>
    %cst_6 = arith.constant 3.125000e-02 : f32
    %18 = vector.broadcast %cst_6 : f32 to vector<32x1xf32>
    %19 = arith.mulf %17, %18 : vector<32x1xf32>
    %cst_7 = arith.constant 9.99999974E-6 : f32
    %20 = vector.broadcast %cst_7 : f32 to vector<32x1xf32>
    %21 = arith.addf %19, %20 : vector<32x1xf32>
    %22 = math.rsqrt %21 : vector<32x1xf32>
    %23 = vector.broadcast %22 : vector<32x1xf32> to vector<32x128xf32>
    %24 = arith.mulf %14, %23 : vector<32x128xf32>
    %c0_8 = arith.constant 0 : index
    %c0_9 = arith.constant 0 : index
    %25 = vector.load %arg3[%c0_8, %c0_9] : memref<1x128xf32, #tpu.memory_space<vmem>>, vector<1x128xf32>
    %26 = vector.broadcast %25 : vector<1x128xf32> to vector<32x128xf32>
    %27 = arith.mulf %24, %26 : vector<32x128xf32>
    %c0_10 = arith.constant 0 : index
    %c0_11 = arith.constant 0 : index
    %28 = vector.load %arg4[%c0_10, %c0_11] : memref<1x128xf32, #tpu.memory_space<vmem>>, vector<1x128xf32>
    %29 = vector.broadcast %28 : vector<1x128xf32> to vector<32x128xf32>
    %30 = arith.addf %27, %29 : vector<32x128xf32>
    %31 = arith.truncf %30 : vector<32x128xf32> to vector<32x128xbf16>
    %c0_12 = arith.constant 0 : index
    %c0_13 = arith.constant 0 : index
    %32 = vector.load %arg5[%c0_12, %c0_13] : memref<128x256xbf16, #tpu.memory_space<vmem>>, vector<128x256xbf16>
    %cst_14 = arith.constant dense<0.000000e+00> : vector<32x256xf32>
    %33 = tpu.matmul %31, %32, %cst_14 {dimension_numbers = #tpu.dot_dimension_numbers<[1], [0], [0], [1], [0, 0, 1, 1], [], []>} : vector<32x128xbf16>, vector<128x256xbf16>, vector<32x256xf32> -> vector<32x256xf32>
    %c0_15 = arith.constant 0 : index
    %c0_16 = arith.constant 0 : index
    %34 = vector.load %arg6[%c0_15, %c0_16] : memref<1x256xf32, #tpu.memory_space<vmem>>, vector<1x256xf32>
    %35 = vector.broadcast %34 : vector<1x256xf32> to vector<32x256xf32>
    %36 = arith.addf %33, %35 : vector<32x256xf32>
    %37 = vector.extract_strided_slice %36 {offsets = [0, 0], sizes = [32, 128], strides = [1, 1]} : vector<32x256xf32> to vector<32x128xf32>
    %38 = vector.extract_strided_slice %36 {offsets = [0, 128], sizes = [32, 128], strides = [1, 1]} : vector<32x256xf32> to vector<32x128xf32>
    %39 = arith.negf %38 : vector<32x128xf32>
    %40 = math.exp %39 : vector<32x128xf32>
    %cst_17 = arith.constant 1.000000e+00 : f32
    %41 = vector.broadcast %cst_17 : f32 to vector<32x128xf32>
    %42 = arith.addf %41, %40 : vector<32x128xf32>
    %43 = arith.divf %41, %42 : vector<32x128xf32>
    %44 = arith.mulf %37, %43 : vector<32x128xf32>
    %c16_i32 = arith.constant 16 : i32
    %45 = arith.muli %arg1, %c16_i32 : i32
    %c8_i32 = arith.constant 8 : i32
    %46 = arith.subi %45, %c8_i32 : i32
    %47 = tpu.iota {dimensions = array<i32: 0>} : vector<32x1xi32>
    %48 = vector.broadcast %46 : i32 to vector<32x1xi32>
    %49 = arith.addi %48, %47 : vector<32x1xi32>
    %c0_i32 = arith.constant 0 : i32
    %50 = vector.broadcast %c0_i32 : i32 to vector<32x1xi32>
    %51 = arith.cmpi sge, %49, %50 : vector<32x1xi32>
    %c16_i32_18 = arith.constant 16 : i32
    %52 = vector.broadcast %c16_i32_18 : i32 to vector<32x1xi32>
    %53 = arith.cmpi slt, %49, %52 : vector<32x1xi32>
    %54 = arith.andi %51, %53 : vector<32x1xi1>
    %cst_19 = arith.constant 0.000000e+00 : f32
    %55 = vector.shape_cast %54 : vector<32x1xi1> to vector<32x1xi1>
    %56 = vector.broadcast %55 : vector<32x1xi1> to vector<32x128xi1>
    %57 = vector.broadcast %cst_19 : f32 to vector<32x128xf32>
    %58 = arith.select %56, %44, %57 : vector<32x128xi1>, vector<32x128xf32>
    %c27_i32 = arith.constant 27 : i32
    %59 = tpu.dynamic_rotate %58 by %c27_i32 dim 0 : vector<32x128xf32>, i32 -> vector<32x128xf32>
    %c0_20 = arith.constant 0 : index
    %c0_21 = arith.constant 0 : index
    %60 = vector.load %arg7[%c0_20, %c0_21] : memref<7x128xf32, #tpu.memory_space<vmem>>, vector<7x128xf32>
    %cst_22 = arith.constant 0.000000e+00 : f32
    %61 = vector.broadcast %cst_22 : f32 to vector<16x128xf32>
    %62 = vector.extract_strided_slice %59 {offsets = [0, 0], sizes = [16, 128], strides = [1, 1]} : vector<32x128xf32> to vector<16x128xf32>
    %63 = vector.extract_strided_slice %60 {offsets = [0, 0], sizes = [1, 128], strides = [1, 1]} : vector<7x128xf32> to vector<1x128xf32>
    %64 = vector.broadcast %63 : vector<1x128xf32> to vector<16x128xf32>
    %65 = arith.mulf %62, %64 : vector<16x128xf32>
    %66 = arith.addf %61, %65 : vector<16x128xf32>
    %c31_i32 = arith.constant 31 : i32
    %67 = tpu.dynamic_rotate %59 by %c31_i32 dim 0 : vector<32x128xf32>, i32 -> vector<32x128xf32>
    %68 = vector.extract_strided_slice %67 {offsets = [0, 0], sizes = [16, 128], strides = [1, 1]} : vector<32x128xf32> to vector<16x128xf32>
    %69 = vector.extract_strided_slice %60 {offsets = [1, 0], sizes = [1, 128], strides = [1, 1]} : vector<7x128xf32> to vector<1x128xf32>
    %70 = vector.broadcast %69 : vector<1x128xf32> to vector<16x128xf32>
    %71 = arith.mulf %68, %70 : vector<16x128xf32>
    %72 = arith.addf %66, %71 : vector<16x128xf32>
    %c31_i32_23 = arith.constant 31 : i32
    %73 = tpu.dynamic_rotate %67 by %c31_i32_23 dim 0 : vector<32x128xf32>, i32 -> vector<32x128xf32>
    %74 = vector.extract_strided_slice %73 {offsets = [0, 0], sizes = [16, 128], strides = [1, 1]} : vector<32x128xf32> to vector<16x128xf32>
    %75 = vector.extract_strided_slice %60 {offsets = [2, 0], sizes = [1, 128], strides = [1, 1]} : vector<7x128xf32> to vector<1x128xf32>
    %76 = vector.broadcast %75 : vector<1x128xf32> to vector<16x128xf32>
    %77 = arith.mulf %74, %76 : vector<16x128xf32>
    %78 = arith.addf %72, %77 : vector<16x128xf32>
    %c31_i32_24 = arith.constant 31 : i32
    %79 = tpu.dynamic_rotate %73 by %c31_i32_24 dim 0 : vector<32x128xf32>, i32 -> vector<32x128xf32>
    %80 = vector.extract_strided_slice %79 {offsets = [0, 0], sizes = [16, 128], strides = [1, 1]} : vector<32x128xf32> to vector<16x128xf32>
    %81 = vector.extract_strided_slice %60 {offsets = [3, 0], sizes = [1, 128], strides = [1, 1]} : vector<7x128xf32> to vector<1x128xf32>
    %82 = vector.broadcast %81 : vector<1x128xf32> to vector<16x128xf32>
    %83 = arith.mulf %80, %82 : vector<16x128xf32>
    %84 = arith.addf %78, %83 : vector<16x128xf32>
    %c31_i32_25 = arith.constant 31 : i32
    %85 = tpu.dynamic_rotate %79 by %c31_i32_25 dim 0 : vector<32x128xf32>, i32 -> vector<32x128xf32>
    %86 = vector.extract_strided_slice %85 {offsets = [0, 0], sizes = [16, 128], strides = [1, 1]} : vector<32x128xf32> to vector<16x128xf32>
    %87 = vector.extract_strided_slice %60 {offsets = [4, 0], sizes = [1, 128], strides = [1, 1]} : vector<7x128xf32> to vector<1x128xf32>
    %88 = vector.broadcast %87 : vector<1x128xf32> to vector<16x128xf32>
    %89 = arith.mulf %86, %88 : vector<16x128xf32>
    %90 = arith.addf %84, %89 : vector<16x128xf32>
    %c31_i32_26 = arith.constant 31 : i32
    %91 = tpu.dynamic_rotate %85 by %c31_i32_26 dim 0 : vector<32x128xf32>, i32 -> vector<32x128xf32>
    %92 = vector.extract_strided_slice %91 {offsets = [0, 0], sizes = [16, 128], strides = [1, 1]} : vector<32x128xf32> to vector<16x128xf32>
    %93 = vector.extract_strided_slice %60 {offsets = [5, 0], sizes = [1, 128], strides = [1, 1]} : vector<7x128xf32> to vector<1x128xf32>
    %94 = vector.broadcast %93 : vector<1x128xf32> to vector<16x128xf32>
    %95 = arith.mulf %92, %94 : vector<16x128xf32>
    %96 = arith.addf %90, %95 : vector<16x128xf32>
    %c31_i32_27 = arith.constant 31 : i32
    %97 = tpu.dynamic_rotate %91 by %c31_i32_27 dim 0 : vector<32x128xf32>, i32 -> vector<32x128xf32>
    %98 = vector.extract_strided_slice %97 {offsets = [0, 0], sizes = [16, 128], strides = [1, 1]} : vector<32x128xf32> to vector<16x128xf32>
    %99 = vector.extract_strided_slice %60 {offsets = [6, 0], sizes = [1, 128], strides = [1, 1]} : vector<7x128xf32> to vector<1x128xf32>
    %100 = vector.broadcast %99 : vector<1x128xf32> to vector<16x128xf32>
    %101 = arith.mulf %98, %100 : vector<16x128xf32>
    %102 = arith.addf %96, %101 : vector<16x128xf32>
    %c0_28 = arith.constant 0 : index
    %c0_29 = arith.constant 0 : index
    %103 = vector.load %arg8[%c0_28, %c0_29] : memref<1x128xf32, #tpu.memory_space<vmem>>, vector<1x128xf32>
    %104 = vector.broadcast %103 : vector<1x128xf32> to vector<16x128xf32>
    %105 = arith.addf %102, %104 : vector<16x128xf32>
    %c0_30 = arith.constant 0 : index
    %c0_31 = arith.constant 0 : index
    %106 = vector.load %arg9[%c0_30, %c0_31] : memref<1x128xf32, #tpu.memory_space<vmem>>, vector<1x128xf32>
    %107 = vector.broadcast %106 : vector<1x128xf32> to vector<16x128xf32>
    %108 = arith.mulf %105, %107 : vector<16x128xf32>
    %c0_32 = arith.constant 0 : index
    %c0_33 = arith.constant 0 : index
    %109 = vector.load %arg10[%c0_32, %c0_33] : memref<1x128xf32, #tpu.memory_space<vmem>>, vector<1x128xf32>
    %110 = vector.broadcast %109 : vector<1x128xf32> to vector<16x128xf32>
    %111 = arith.addf %108, %110 : vector<16x128xf32>
    %112 = arith.negf %111 : vector<16x128xf32>
    %113 = math.exp %112 : vector<16x128xf32>
    %cst_34 = arith.constant 1.000000e+00 : f32
    %114 = vector.broadcast %cst_34 : f32 to vector<16x128xf32>
    %115 = arith.addf %114, %113 : vector<16x128xf32>
    %116 = arith.divf %114, %115 : vector<16x128xf32>
    %117 = arith.mulf %111, %116 : vector<16x128xf32>
    %118 = arith.truncf %117 : vector<16x128xf32> to vector<16x128xbf16>
    %c0_35 = arith.constant 0 : index
    %c0_36 = arith.constant 0 : index
    %119 = vector.load %arg11[%c0_35, %c0_36] : memref<128x128xbf16, #tpu.memory_space<vmem>>, vector<128x128xbf16>
    %cst_37 = arith.constant dense<0.000000e+00> : vector<16x128xf32>
    %120 = tpu.matmul %118, %119, %cst_37 {dimension_numbers = #tpu.dot_dimension_numbers<[1], [0], [0], [1], [0, 0, 1, 1], [], []>} : vector<16x128xbf16>, vector<128x128xbf16>, vector<16x128xf32> -> vector<16x128xf32>
    %c0_38 = arith.constant 0 : index
    %c0_39 = arith.constant 0 : index
    %121 = vector.load %arg12[%c0_38, %c0_39] : memref<1x128xf32, #tpu.memory_space<vmem>>, vector<1x128xf32>
    %122 = vector.broadcast %121 : vector<1x128xf32> to vector<16x128xf32>
    %123 = arith.addf %120, %122 : vector<16x128xf32>
    %c0_40 = arith.constant 0 : index
    %c0_41 = arith.constant 0 : index
    %c0_42 = arith.constant 0 : index
    %124 = vector.load %arg13[%c0_40, %c0_41, %c0_42] : memref<1x16x128xf32, #tpu.memory_space<vmem>>, vector<1x16x128xf32>
    %125 = vector.shape_cast %124 : vector<1x16x128xf32> to vector<16x128xf32>
    %126 = vector.shape_cast %123 : vector<16x128xf32> to vector<1x16x128xf32>
    tpu.vector_store %arg13[%c0_40, %c0_41, %c0_42], %126 {strides = array<i32>} : memref<1x16x128xf32, #tpu.memory_space<vmem>>, vector<1x16x128xf32>,
    return
  }
  func.func @transform_0(%arg0: i32, %arg1: i32) -> (i32, i32, i32, i32) {
    %c0_i32 = arith.constant 0 : i32
    %c0_i32_0 = arith.constant 0 : i32
    %c0_i32_1 = arith.constant 0 : i32
    return %arg0, %arg1, %c0_i32, %c0_i32_0 : i32, i32, i32, i32
  }
  func.func @transform_1(%arg0: i32, %arg1: i32) -> (i32, i32) {
    %c0_i32 = arith.constant 0 : i32
    %c0_i32_0 = arith.constant 0 : i32
    %c0_i32_1 = arith.constant 0 : i32
    return %c0_i32, %c0_i32_0 : i32, i32
  }
  func.func @transform_2(%arg0: i32, %arg1: i32) -> (i32, i32) {
    %c0_i32 = arith.constant 0 : i32
    %c0_i32_0 = arith.constant 0 : i32
    %c0_i32_1 = arith.constant 0 : i32
    return %c0_i32, %c0_i32_0 : i32, i32
  }
  func.func @transform_3(%arg0: i32, %arg1: i32) -> (i32, i32) {
    %c0_i32 = arith.constant 0 : i32
    %c0_i32_0 = arith.constant 0 : i32
    %c0_i32_1 = arith.constant 0 : i32
    return %c0_i32, %c0_i32_0 : i32, i32
  }
  func.func @transform_4(%arg0: i32, %arg1: i32) -> (i32, i32) {
    %c0_i32 = arith.constant 0 : i32
    %c0_i32_0 = arith.constant 0 : i32
    %c0_i32_1 = arith.constant 0 : i32
    return %c0_i32, %c0_i32_0 : i32, i32
  }
  func.func @transform_5(%arg0: i32, %arg1: i32) -> (i32, i32) {
    %c0_i32 = arith.constant 0 : i32
    %c0_i32_0 = arith.constant 0 : i32
    %c0_i32_1 = arith.constant 0 : i32
    return %c0_i32, %c0_i32_0 : i32, i32
  }
  func.func @transform_6(%arg0: i32, %arg1: i32) -> (i32, i32) {
    %c0_i32 = arith.constant 0 : i32
    %c0_i32_0 = arith.constant 0 : i32
    %c0_i32_1 = arith.constant 0 : i32
    return %c0_i32, %c0_i32_0 : i32, i32
  }
  func.func @transform_7(%arg0: i32, %arg1: i32) -> (i32, i32) {
    %c0_i32 = arith.constant 0 : i32
    %c0_i32_0 = arith.constant 0 : i32
    %c0_i32_1 = arith.constant 0 : i32
    return %c0_i32, %c0_i32_0 : i32, i32
  }
  func.func @transform_8(%arg0: i32, %arg1: i32) -> (i32, i32) {
    %c0_i32 = arith.constant 0 : i32
    %c0_i32_0 = arith.constant 0 : i32
    %c0_i32_1 = arith.constant 0 : i32
    return %c0_i32, %c0_i32_0 : i32, i32
  }
  func.func @transform_9(%arg0: i32, %arg1: i32) -> (i32, i32) {
    %c0_i32 = arith.constant 0 : i32
    %c0_i32_0 = arith.constant 0 : i32
    %c0_i32_1 = arith.constant 0 : i32
    return %c0_i32, %c0_i32_0 : i32, i32
  }
  func.func @transform_10(%arg0: i32, %arg1: i32) -> (i32, i32) {
    %c0_i32 = arith.constant 0 : i32
    %c0_i32_0 = arith.constant 0 : i32
    %c0_i32_1 = arith.constant 0 : i32
    return %c0_i32, %c0_i32_0 : i32, i32
  }
  func.func @transform_11(%arg0: i32, %arg1: i32) -> (i32, i32, i32) {
    %c0_i32 = arith.constant 0 : i32
    %c0_i32_0 = arith.constant 0 : i32
    return %arg0, %arg1, %c0_i32 : i32, i32, i32
  }
}

module attributes {stable_mosaic.version = 11 : i64} {
  func.func @_conv_module_kernel(%arg0: i32, %arg1: i32, %arg2: memref<1x1x32x128xf32, #tpu.memory_space<vmem>>, %arg3: memref<1x128xf32, #tpu.memory_space<vmem>>, %arg4: memref<1x128xf32, #tpu.memory_space<vmem>>, %arg5: memref<128x256xbf16, #tpu.memory_space<vmem>>, %arg6: memref<1x256xf32, #tpu.memory_space<vmem>>, %arg7: memref<7x128xf32, #tpu.memory_space<vmem>>, %arg8: memref<1x128xf32, #tpu.memory_space<vmem>>, %arg9: memref<1x128xf32, #tpu.memory_space<vmem>>, %arg10: memref<1x128xf32, #tpu.memory_space<vmem>>, %arg11: memref<128x128xbf16, #tpu.memory_space<vmem>>, %arg12: memref<1x128xf32, #tpu.memory_space<vmem>>, %arg13: memref<1x16x128xf32, #tpu.memory_space<vmem>>) attributes {dimension_semantics = [#tpu.dimension_semantics<parallel>, #tpu.dimension_semantics<parallel>], iteration_bounds = array<i64: 2, 1>, scalar_prefetch = 0 : i64, scratch_operands = 0 : i64, tpu.core_type = #tpu.core_type<tc>, window_params = [{transform_indices = @transform_0, window_bounds = array<i64: 1, 1, 32, 128>}, {pipeline_mode = #tpu.pipeline_mode<synchronous>, transform_indices = @transform_1, window_bounds = array<i64: 1, 128>}, {pipeline_mode = #tpu.pipeline_mode<synchronous>, transform_indices = @transform_2, window_bounds = array<i64: 1, 128>}, {pipeline_mode = #tpu.pipeline_mode<synchronous>, transform_indices = @transform_3, window_bounds = array<i64: 128, 256>}, {pipeline_mode = #tpu.pipeline_mode<synchronous>, transform_indices = @transform_4, window_bounds = array<i64: 1, 256>}, {pipeline_mode = #tpu.pipeline_mode<synchronous>, transform_indices = @transform_5, window_bounds = array<i64: 7, 128>}, {pipeline_mode = #tpu.pipeline_mode<synchronous>, transform_indices = @transform_6, window_bounds = array<i64: 1, 128>}, {pipeline_mode = #tpu.pipeline_mode<synchronous>, transform_indices = @transform_7, window_bounds = array<i64: 1, 128>}, {pipeline_mode = #tpu.pipeline_mode<synchronous>, transform_indices = @transform_8, window_bounds = array<i64: 1, 128>}, {pipeline_mode = #tpu.pipeline_mode<synchronous>, transform_indices = @transform_9, window_bounds = array<i64: 128, 128>}, {pipeline_mode = #tpu.pipeline_mode<synchronous>, transform_indices = @transform_10, window_bounds = array<i64: 1, 128>}, {transform_indices = @transform_11, window_bounds = array<i64: 1, 16, 128>}]} {
    %c0 = arith.constant 0 : index
    %c0_0 = arith.constant 0 : index
    %c0_1 = arith.constant 0 : index
    %c0_2 = arith.constant 0 : index
    %0 = vector.load %arg2[%c0, %c0_0, %c0_1, %c0_2] : memref<1x1x32x128xf32, #tpu.memory_space<vmem>>, vector<1x1x32x128xf32>
    %1 = vector.shape_cast %0 : vector<1x1x32x128xf32> to vector<32x128xf32>
    %2 = tpu.iota {dimensions = array<i32: 1>} : vector<1x128xi32>
    %c32_i32 = arith.constant 32 : i32
    %3 = vector.broadcast %c32_i32 : i32 to vector<1x128xi32>
    %4 = arith.cmpi slt, %2, %3 : vector<1x128xi32>
    %cst = arith.constant dense<0.000000e+00> : vector<32xf32>
    %5 = vector.multi_reduction <add>, %1, %cst [1] : vector<32x128xf32> to vector<32xf32>
    %6 = vector.shape_cast %5 : vector<32xf32> to vector<32x1xf32>
    %cst_3 = arith.constant 3.125000e-02 : f32
    %7 = vector.broadcast %cst_3 : f32 to vector<32x1xf32>
    %8 = arith.mulf %6, %7 : vector<32x1xf32>
    %9 = vector.broadcast %8 : vector<32x1xf32> to vector<32x128xf32>
    %10 = arith.subf %1, %9 : vector<32x128xf32>
    %cst_4 = arith.constant 0.000000e+00 : f32
    %11 = vector.shape_cast %4 : vector<1x128xi1> to vector<1x128xi1>
    %12 = vector.broadcast %11 : vector<1x128xi1> to vector<32x128xi1>
    %13 = vector.broadcast %cst_4 : f32 to vector<32x128xf32>
    %14 = arith.select %12, %10, %13 : vector<32x128xi1>, vector<32x128xf32>
    %15 = arith.mulf %14, %14 : vector<32x128xf32>
    %cst_5 = arith.constant dense<0.000000e+00> : vector<32xf32>
    %16 = vector.multi_reduction <add>, %15, %cst_5 [1] : vector<32x128xf32> to vector<32xf32>
    %17 = vector.shape_cast %16 : vector<32xf32> to vector<32x1xf32>
    %cst_6 = arith.constant 3.125000e-02 : f32
    %18 = vector.broadcast %cst_6 : f32 to vector<32x1xf32>
    %19 = arith.mulf %17, %18 : vector<32x1xf32>
    %cst_7 = arith.constant 9.99999974E-6 : f32
    %20 = vector.broadcast %cst_7 : f32 to vector<32x1xf32>
    %21 = arith.addf %19, %20 : vector<32x1xf32>
    %22 = math.rsqrt %21 : vector<32x1xf32>
    %23 = vector.broadcast %22 : vector<32x1xf32> to vector<32x128xf32>
    %24 = arith.mulf %14, %23 : vector<32x128xf32>
    %c0_8 = arith.constant 0 : index
    %c0_9 = arith.constant 0 : index
    %25 = vector.load %arg3[%c0_8, %c0_9] : memref<1x128xf32, #tpu.memory_space<vmem>>, vector<1x128xf32>
    %26 = vector.broadcast %25 : vector<1x128xf32> to vector<32x128xf32>
    %27 = arith.mulf %24, %26 : vector<32x128xf32>
    %c0_10 = arith.constant 0 : index
    %c0_11 = arith.constant 0 : index
    %28 = vector.load %arg4[%c0_10, %c0_11] : memref<1x128xf32, #tpu.memory_space<vmem>>, vector<1x128xf32>
    %29 = vector.broadcast %28 : vector<1x128xf32> to vector<32x128xf32>
    %30 = arith.addf %27, %29 : vector<32x128xf32>
    %31 = arith.truncf %30 : vector<32x128xf32> to vector<32x128xbf16>
    %c0_12 = arith.constant 0 : index
    %c0_13 = arith.constant 0 : index
    %32 = vector.load %arg5[%c0_12, %c0_13] : memref<128x256xbf16, #tpu.memory_space<vmem>>, vector<128x256xbf16>
    %cst_14 = arith.constant dense<0.000000e+00> : vector<32x256xf32>
    %33 = tpu.matmul %31, %32, %cst_14 {dimension_numbers = #tpu.dot_dimension_numbers<[1], [0], [0], [1], [0, 0, 1, 1], [], []>} : vector<32x128xbf16>, vector<128x256xbf16>, vector<32x256xf32> -> vector<32x256xf32>
    %c0_15 = arith.constant 0 : index
    %c0_16 = arith.constant 0 : index
    %34 = vector.load %arg6[%c0_15, %c0_16] : memref<1x256xf32, #tpu.memory_space<vmem>>, vector<1x256xf32>
    %35 = vector.broadcast %34 : vector<1x256xf32> to vector<32x256xf32>
    %36 = arith.addf %33, %35 : vector<32x256xf32>
    %37 = vector.extract_strided_slice %36 {offsets = [0, 0], sizes = [32, 128], strides = [1, 1]} : vector<32x256xf32> to vector<32x128xf32>
    %38 = vector.extract_strided_slice %36 {offsets = [0, 128], sizes = [32, 128], strides = [1, 1]} : vector<32x256xf32> to vector<32x128xf32>
    %39 = arith.negf %38 : vector<32x128xf32>
    %40 = math.exp %39 : vector<32x128xf32>
    %cst_17 = arith.constant 1.000000e+00 : f32
    %41 = vector.broadcast %cst_17 : f32 to vector<32x128xf32>
    %42 = arith.addf %41, %40 : vector<32x128xf32>
    %43 = arith.divf %41, %42 : vector<32x128xf32>
    %44 = arith.mulf %37, %43 : vector<32x128xf32>
    %c16_i32 = arith.constant 16 : i32
    %45 = arith.muli %arg1, %c16_i32 : i32
    %c8_i32 = arith.constant 8 : i32
    %46 = arith.subi %45, %c8_i32 : i32
    %47 = tpu.iota {dimensions = array<i32: 0>} : vector<32x1xi32>
    %48 = vector.broadcast %46 : i32 to vector<32x1xi32>
    %49 = arith.addi %48, %47 : vector<32x1xi32>
    %c0_i32 = arith.constant 0 : i32
    %50 = vector.broadcast %c0_i32 : i32 to vector<32x1xi32>
    %51 = arith.cmpi sge, %49, %50 : vector<32x1xi32>
    %c16_i32_18 = arith.constant 16 : i32
    %52 = vector.broadcast %c16_i32_18 : i32 to vector<32x1xi32>
    %53 = arith.cmpi slt, %49, %52 : vector<32x1xi32>
    %54 = arith.andi %51, %53 : vector<32x1xi1>
    %cst_19 = arith.constant 0.000000e+00 : f32
    %55 = vector.shape_cast %54 : vector<32x1xi1> to vector<32x1xi1>
    %56 = vector.broadcast %55 : vector<32x1xi1> to vector<32x128xi1>
    %57 = vector.broadcast %cst_19 : f32 to vector<32x128xf32>
    %58 = arith.select %56, %44, %57 : vector<32x128xi1>, vector<32x128xf32>
    %c27_i32 = arith.constant 27 : i32
    %59 = tpu.dynamic_rotate %58 by %c27_i32 dim 0 : vector<32x128xf32>, i32 -> vector<32x128xf32>
    %c0_20 = arith.constant 0 : index
    %c0_21 = arith.constant 0 : index
    %60 = vector.load %arg7[%c0_20, %c0_21] : memref<7x128xf32, #tpu.memory_space<vmem>>, vector<7x128xf32>
    %cst_22 = arith.constant 0.000000e+00 : f32
    %61 = vector.broadcast %cst_22 : f32 to vector<16x128xf32>
    %62 = vector.extract_strided_slice %59 {offsets = [0, 0], sizes = [16, 128], strides = [1, 1]} : vector<32x128xf32> to vector<16x128xf32>
    %63 = vector.extract_strided_slice %60 {offsets = [0, 0], sizes = [1, 128], strides = [1, 1]} : vector<7x128xf32> to vector<1x128xf32>
    %64 = vector.broadcast %63 : vector<1x128xf32> to vector<16x128xf32>
    %65 = arith.mulf %62, %64 : vector<16x128xf32>
    %66 = arith.addf %61, %65 : vector<16x128xf32>
    %c31_i32 = arith.constant 31 : i32
    %67 = tpu.dynamic_rotate %59 by %c31_i32 dim 0 : vector<32x128xf32>, i32 -> vector<32x128xf32>
    %68 = vector.extract_strided_slice %67 {offsets = [0, 0], sizes = [16, 128], strides = [1, 1]} : vector<32x128xf32> to vector<16x128xf32>
    %69 = vector.extract_strided_slice %60 {offsets = [1, 0], sizes = [1, 128], strides = [1, 1]} : vector<7x128xf32> to vector<1x128xf32>
    %70 = vector.broadcast %69 : vector<1x128xf32> to vector<16x128xf32>
    %71 = arith.mulf %68, %70 : vector<16x128xf32>
    %72 = arith.addf %66, %71 : vector<16x128xf32>
    %c31_i32_23 = arith.constant 31 : i32
    %73 = tpu.dynamic_rotate %67 by %c31_i32_23 dim 0 : vector<32x128xf32>, i32 -> vector<32x128xf32>
    %74 = vector.extract_strided_slice %73 {offsets = [0, 0], sizes = [16, 128], strides = [1, 1]} : vector<32x128xf32> to vector<16x128xf32>
    %75 = vector.extract_strided_slice %60 {offsets = [2, 0], sizes = [1, 128], strides = [1, 1]} : vector<7x128xf32> to vector<1x128xf32>
    %76 = vector.broadcast %75 : vector<1x128xf32> to vector<16x128xf32>
    %77 = arith.mulf %74, %76 : vector<16x128xf32>
    %78 = arith.addf %72, %77 : vector<16x128xf32>
    %c31_i32_24 = arith.constant 31 : i32
    %79 = tpu.dynamic_rotate %73 by %c31_i32_24 dim 0 : vector<32x128xf32>, i32 -> vector<32x128xf32>
    %80 = vector.extract_strided_slice %79 {offsets = [0, 0], sizes = [16, 128], strides = [1, 1]} : vector<32x128xf32> to vector<16x128xf32>
    %81 = vector.extract_strided_slice %60 {offsets = [3, 0], sizes = [1, 128], strides = [1, 1]} : vector<7x128xf32> to vector<1x128xf32>
    %82 = vector.broadcast %81 : vector<1x128xf32> to vector<16x128xf32>
    %83 = arith.mulf %80, %82 : vector<16x128xf32>
    %84 = arith.addf %78, %83 : vector<16x128xf32>
    %c31_i32_25 = arith.constant 31 : i32
    %85 = tpu.dynamic_rotate %79 by %c31_i32_25 dim 0 : vector<32x128xf32>, i32 -> vector<32x128xf32>
    %86 = vector.extract_strided_slice %85 {offsets = [0, 0], sizes = [16, 128], strides = [1, 1]} : vector<32x128xf32> to vector<16x128xf32>
    %87 = vector.extract_strided_slice %60 {offsets = [4, 0], sizes = [1, 128], strides = [1, 1]} : vector<7x128xf32> to vector<1x128xf32>
    %88 = vector.broadcast %87 : vector<1x128xf32> to vector<16x128xf32>
    %89 = arith.mulf %86, %88 : vector<16x128xf32>
    %90 = arith.addf %84, %89 : vector<16x128xf32>
    %c31_i32_26 = arith.constant 31 : i32
    %91 = tpu.dynamic_rotate %85 by %c31_i32_26 dim 0 : vector<32x128xf32>, i32 -> vector<32x128xf32>
    %92 = vector.extract_strided_slice %91 {offsets = [0, 0], sizes = [16, 128], strides = [1, 1]} : vector<32x128xf32> to vector<16x128xf32>
    %93 = vector.extract_strided_slice %60 {offsets = [5, 0], sizes = [1, 128], strides = [1, 1]} : vector<7x128xf32> to vector<1x128xf32>
    %94 = vector.broadcast %93 : vector<1x128xf32> to vector<16x128xf32>
    %95 = arith.mulf %92, %94 : vector<16x128xf32>
    %96 = arith.addf %90, %95 : vector<16x128xf32>
    %c31_i32_27 = arith.constant 31 : i32
    %97 = tpu.dynamic_rotate %91 by %c31_i32_27 dim 0 : vector<32x128xf32>, i32 -> vector<32x128xf32>
    %98 = vector.extract_strided_slice %97 {offsets = [0, 0], sizes = [16, 128], strides = [1, 1]} : vector<32x128xf32> to vector<16x128xf32>
    %99 = vector.extract_strided_slice %60 {offsets = [6, 0], sizes = [1, 128], strides = [1, 1]} : vector<7x128xf32> to vector<1x128xf32>
    %100 = vector.broadcast %99 : vector<1x128xf32> to vector<16x128xf32>
    %101 = arith.mulf %98, %100 : vector<16x128xf32>
    %102 = arith.addf %96, %101 : vector<16x128xf32>
    %c0_28 = arith.constant 0 : index
    %c0_29 = arith.constant 0 : index
    %103 = vector.load %arg8[%c0_28, %c0_29] : memref<1x128xf32, #tpu.memory_space<vmem>>, vector<1x128xf32>
    %104 = vector.broadcast %103 : vector<1x128xf32> to vector<16x128xf32>
    %105 = arith.addf %102, %104 : vector<16x128xf32>
    %c0_30 = arith.constant 0 : index
    %c0_31 = arith.constant 0 : index
    %106 = vector.load %arg9[%c0_30, %c0_31] : memref<1x128xf32, #tpu.memory_space<vmem>>, vector<1x128xf32>
    %107 = vector.broadcast %106 : vector<1x128xf32> to vector<16x128xf32>
    %108 = arith.mulf %105, %107 : vector<16x128xf32>
    %c0_32 = arith.constant 0 : index
    %c0_33 = arith.constant 0 : index
    %109 = vector.load %arg10[%c0_32, %c0_33] : memref<1x128xf32, #tpu.memory_space<vmem>>, vector<1x128xf32>
    %110 = vector.broadcast %109 : vector<1x128xf32> to vector<16x128xf32>
    %111 = arith.addf %108, %110 : vector<16x128xf32>
    %112 = arith.negf %111 : vector<16x128xf32>
    %113 = math.exp %112 : vector<16x128xf32>
    %cst_34 = arith.constant 1.000000e+00 : f32
    %114 = vector.broadcast %cst_34 : f32 to vector<16x128xf32>
    %115 = arith.addf %114, %113 : vector<16x128xf32>
    %116 = arith.divf %114, %115 : vector<16x128xf32>
    %117 = arith.mulf %111, %116 : vector<16x128xf32>
    %118 = arith.truncf %117 : vector<16x128xf32> to vector<16x128xbf16>
    %c0_35 = arith.constant 0 : index
    %c0_36 = arith.constant 0 : index
    %119 = vector.load %arg11[%c0_35, %c0_36] : memref<128x128xbf16, #tpu.memory_space<vmem>>, vector<128x128xbf16>
    %cst_37 = arith.constant dense<0.000000e+00> : vector<16x128xf32>
    %120 = tpu.matmul %118, %119, %cst_37 {dimension_numbers = #tpu.dot_dimension_numbers<[1], [0], [0], [1], [0, 0, 1, 1], [], []>} : vector<16x128xbf16>, vector<128x128xbf16>, vector<16x128xf32> -> vector<16x128xf32>
    %c0_38 = arith.constant 0 : index
    %c0_39 = arith.constant 0 : index
    %121 = vector.load %arg12[%c0_38, %c0_39] : memref<1x128xf32, #tpu.memory_space<vmem>>, vector<1x128xf32>
    %122 = vector.broadcast %121 : vector<1x128xf32> to vector<16x128xf32>
    %123 = arith.addf %120, %122 : vector<16x128xf32>
    %c0_40 = arith.constant 0 : index
    %c0_41 = arith.constant 0 : index
    %c0_42 = arith.constant 0 : index
    %124 = vector.load %arg13[%c0_40, %c0_41, %c0_42] : memref<1x16x128xf32, #tpu.memory_space<vmem>>, vector<1x16x128xf32>
    %125 = vector.shape_cast %124 : vector<1x16x128xf32> to vector<16x128xf32>
    %126 = vector.shape_cast %123 : vector<16x128xf32> to vector<1x16x128xf32>
    tpu.vector_store %arg13[%c0_40, %c0_41, %c0_42], %126 {strides = array<i32>} : memref<1x16x128xf32, #tpu.memory_space<vmem>>, vector<1x16x128xf32>,
    return
  }
  func.func @transform_0(%arg0: i32, %arg1: i32) -> (i32, i32, i32, i32) {
    %c0_i32 = arith.constant 0 : i32
    %c0_i32_0 = arith.constant 0 : i32
    %c0_i32_1 = arith.constant 0 : i32
    return %arg0, %arg1, %c0_i32, %c0_i32_0 : i32, i32, i32, i32
  }
  func.func @transform_1(%arg0: i32, %arg1: i32) -> (i32, i32) {
    %c0_i32 = arith.constant 0 : i32
    %c0_i32_0 = arith.constant 0 : i32
    %c0_i32_1 = arith.constant 0 : i32
    return %c0_i32, %c0_i32_0 : i32, i32
  }
  func.func @transform_2(%arg0: i32, %arg1: i32) -> (i32, i32) {
    %c0_i32 = arith.constant 0 : i32
    %c0_i32_0 = arith.constant 0 : i32
    %c0_i32_1 = arith.constant 0 : i32
    return %c0_i32, %c0_i32_0 : i32, i32
  }
  func.func @transform_3(%arg0: i32, %arg1: i32) -> (i32, i32) {
    %c0_i32 = arith.constant 0 : i32
    %c0_i32_0 = arith.constant 0 : i32
    %c0_i32_1 = arith.constant 0 : i32
    return %c0_i32, %c0_i32_0 : i32, i32
  }
  func.func @transform_4(%arg0: i32, %arg1: i32) -> (i32, i32) {
    %c0_i32 = arith.constant 0 : i32
    %c0_i32_0 = arith.constant 0 : i32
    %c0_i32_1 = arith.constant 0 : i32
    return %c0_i32, %c0_i32_0 : i32, i32
  }
  func.func @transform_5(%arg0: i32, %arg1: i32) -> (i32, i32) {
    %c0_i32 = arith.constant 0 : i32
    %c0_i32_0 = arith.constant 0 : i32
    %c0_i32_1 = arith.constant 0 : i32
    return %c0_i32, %c0_i32_0 : i32, i32
  }
  func.func @transform_6(%arg0: i32, %arg1: i32) -> (i32, i32) {
    %c0_i32 = arith.constant 0 : i32
    %c0_i32_0 = arith.constant 0 : i32
    %c0_i32_1 = arith.constant 0 : i32
    return %c0_i32, %c0_i32_0 : i32, i32
  }
  func.func @transform_7(%arg0: i32, %arg1: i32) -> (i32, i32) {
    %c0_i32 = arith.constant 0 : i32
    %c0_i32_0 = arith.constant 0 : i32
    %c0_i32_1 = arith.constant 0 : i32
    return %c0_i32, %c0_i32_0 : i32, i32
  }
  func.func @transform_8(%arg0: i32, %arg1: i32) -> (i32, i32) {
    %c0_i32 = arith.constant 0 : i32
    %c0_i32_0 = arith.constant 0 : i32
    %c0_i32_1 = arith.constant 0 : i32
    return %c0_i32, %c0_i32_0 : i32, i32
  }
  func.func @transform_9(%arg0: i32, %arg1: i32) -> (i32, i32) {
    %c0_i32 = arith.constant 0 : i32
    %c0_i32_0 = arith.constant 0 : i32
    %c0_i32_1 = arith.constant 0 : i32
    return %c0_i32, %c0_i32_0 : i32, i32
  }
  func.func @transform_10(%arg0: i32, %arg1: i32) -> (i32, i32) {
    %c0_i32 = arith.constant 0 : i32
    %c0_i32_0 = arith.constant 0 : i32
    %c0_i32_1 = arith.constant 0 : i32
    return %c0_i32, %c0_i32_0 : i32, i32
  }
  func.func @transform_11(%arg0: i32, %arg1: i32) -> (i32, i32, i32) {
    %c0_i32 = arith.constant 0 : i32
    %c0_i32_0 = arith.constant 0 : i32
    return %arg0, %arg1, %c0_i32 : i32, i32, i32
  }
}

</mosaic_0001>

<llo_original>
// kernel: tpu_custom_call.1
$region0: #{tpu_custom_call.1}
  #allocation0 [shape = 'u32[]', space=smem, size = 0x4, offset = 0x4, fixed_abs, tag = 'smem constant byte address 0x4 - core index']
  #allocation1 [shape = 'u32[72,128]{1,0:T(1,128)}', space=vmem, size = 0x9000, scoped, tag = 'internal scratch']
  %s0 = inlined_call_operand.hbm [shape: f32[2,1,32,128], index: 0, kind: input, shape index: {}]
  %s1 = inlined_call_operand.hbm [shape: f32[1,128], index: 1, kind: input, shape index: {}]
  %s2 = inlined_call_operand.vmem [shape: f32[1,128], index: 2, kind: input, shape index: {}]
  %s3 = inlined_call_operand.hbm [shape: bf16[128,256], index: 3, kind: input, shape index: {}]
  %s4 = inlined_call_operand.vmem [shape: f32[1,256], index: 4, kind: input, shape index: {}]
  %s5 = inlined_call_operand.hbm [shape: f32[7,128], index: 5, kind: input, shape index: {}]
  %s6 = inlined_call_operand.vmem [shape: f32[1,128], index: 6, kind: input, shape index: {}]
  %s7 = inlined_call_operand.vmem [shape: f32[1,128], index: 7, kind: input, shape index: {}]
  %s8 = inlined_call_operand.vmem [shape: f32[1,128], index: 8, kind: input, shape index: {}]
  %s9 = inlined_call_operand.hbm [shape: bf16[128,128], index: 9, kind: input, shape index: {}]
  %s10 = inlined_call_operand.vmem [shape: f32[1,128], index: 10, kind: input, shape index: {}]
  %s11 = inlined_call_operand.hbm [shape: f32[2,16,128], index: 11, kind: output, shape index: {}]
  %s12 = sld [smem:[#allocation0]]
  $region97: #{tpu_custom_call.1} parent=0
    _
  %s14 = ssub.s32 1, %s12
  %s15 = scalar_select 0, %s14, %s12
  $region1: #{tpu_custom_call.1} parent=0
    #allocation2 [shape = 'u8[32768]{0}', space=vmem, size = 0x8000, scoped, tag = 'input window, operand 0']
    #allocation3 [shape = 's32[2]{0}', space=sflag, size = 0x8, scoped, tag = 'scoped memory for tpu_custom_call.1']
    #allocation4 [shape = 's32[2]{0}', space=sflag, size = 0x8, scoped, tag = 'scoped memory for tpu_custom_call.1']
    #allocation5 [shape = 'u8[512]{0}', space=vmem, size = 0x400, scoped, tag = 'input window, operand 1, single buffered']
    #allocation6 [shape = 's32[1]{0}', space=sflag, size = 0x4, scoped, tag = 'scoped memory for tpu_custom_call.1']
    #allocation7 [shape = 'u8[65536]{0}', space=vmem, size = 0x10000, scoped, tag = 'input window, operand 3, single buffered']
    #allocation8 [shape = 'u8[4096]{0}', space=vmem, size = 0x1000, scoped, tag = 'input window, operand 5, single buffered']
    #allocation9 [shape = 's32[1]{0}', space=sflag, size = 0x4, scoped, tag = 'scoped memory for tpu_custom_call.1']
    #allocation10 [shape = 'u8[32768]{0}', space=vmem, size = 0x8000, scoped, tag = 'input window, operand 9, single buffered']
    #allocation11 [shape = 'u8[16384]{0}', space=vmem, size = 0x4000, scoped, tag = 'output window, operand 0']
    %16 = vsyncpa [#allocation3], 0
    %s17 = scalar_lea.sflag [#allocation3], 1
    %18 = vsyncpa %s17, 0
    %19 = vsyncpa [#allocation6], 0
    %20 = vsyncpa [#allocation9], 0
    %21 = vsyncpa [#allocation4], 0
    %s22 = scalar_lea.sflag [#allocation4], 1
    %23 = vsyncpa %s22, 0
    loop: start=0, step=1, limit=4
    $region2: #{tpu_custom_call.1} parent=1 // loop_pre_header
      _
    $region3: #{tpu_custom_call.1} parent=1 // loop_header
      %s25 = sphi 0, %s29
      %p26 = scmp.ge.s32.totalorder %s25, 4
      %s32 = sphi 0, %s44
      %s33 = sphi 0, %s40
      %s34 = sphi 0, %s32
      %s35 = sphi 0, %s33
      %s36 = sphi 0, %s34
      %s37 = sphi 0, %s35
      %s49 = sphi 0, %s51
      %s52 = sphi 0, %s49
      %s53 = sphi 0, %s52
      %s69 = sphi 0, %s53
      %s73 = sphi 0, %s73
      %s75 = sphi 0, %s73
      %s76 = sphi 0, %s75
      %s90 = sphi 0, %s76
      %s94 = sphi 0, %s94
      %s96 = sphi 0, %s94
      %s97 = sphi 0, %s96
      %s111 = sphi 0, %s97
      %s115 = sphi 0, %s115
      %s117 = sphi 0, %s115
      %s118 = sphi 0, %s117
      %s132 = sphi 0, %s118
      %s136 = sphi 0, %s136
      %s138 = sphi 0, %s136
      %s139 = sphi 0, %s138
      %s153 = sphi 0, %s139
      %s157 = sphi 0, %s157
      %s159 = sphi 0, %s157
      %s160 = sphi 0, %s159
      %s174 = sphi 0, %s160
      %s178 = sphi 0, %s178
      %s180 = sphi 0, %s178
      %s181 = sphi 0, %s180
      %s195 = sphi 0, %s181
      %s199 = sphi 0, %s199
      %s201 = sphi 0, %s199
      %s202 = sphi 0, %s201
      %s216 = sphi 0, %s202
      %s220 = sphi 0, %s220
      %s222 = sphi 0, %s220
      %s223 = sphi 0, %s222
      %s237 = sphi 0, %s223
      %s241 = sphi 0, %s241
      %s243 = sphi 0, %s241
      %s244 = sphi 0, %s243
      %s258 = sphi 0, %s244
      %s262 = sphi 0, %s262
      %s264 = sphi 0, %s262
      %s265 = sphi 0, %s264
      %s279 = sphi 0, %s265
      %s287 = sphi 0, %s289
      %s290 = sphi 0, %s287
      %s291 = sphi 0, %s290
      %s307 = sphi 0, %s291
    $region4: #{tpu_custom_call.1} parent=1 // loop_header_branch
      %28 = sbr.rel (%p26) target = $region8
    $region5: #{tpu_custom_call.1} parent=1 // loop_body
      %s30 = ssub.s32 %s25, 1
      %s31 = ssub.s32 %s25, 2
      %s38 = sadd.s32 1, %s33
      %p39 = scmp.ge.s32.totalorder %s38, 1
      %s40 = scalar_select %p39, 0, %s38
      %s41 = sadd.s32 1, %s32
      %s42 = scalar_select %p39, %s41, %s32
      %p43 = scmp.ge.s32.totalorder %s42, 2
      %s44 = scalar_select %p43, 0, %s42
      %s45 = ssub.s32 %s32, %s44
      %s46 = ssub.s32 %s33, %s40
      %s47 = sor.u32 %s45, %s46
      %p48 = scmp.eq.s32.totalorder %s47, 0
      %s50 = sadd.s32 %s49, 1
      %s51 = scalar_select %p48, %s49, %s50
      %p54 = pneg %p48
      %p55 = scmp.eq.s32.totalorder %s25, 1
      %p56 = por %p54, %p55
      %p57 = scmp.ne.s32.totalorder %s49, %s52
      %p58 = scmp.eq.s32.totalorder %s25, 0
      %p59 = por %p57, %p58
      %p60 = scmp.ne.s32.totalorder %s49, %s52
      %p61 = scmp.eq.s32.totalorder %s30, 1
      %p62 = por %p60, %p61
      %p63 = scmp.ne.s32.totalorder %s52, %s53
      %p64 = scmp.eq.s32.totalorder %s30, 0
      %p65 = por %p63, %p64
      %p66 = scmp.ne.s32.totalorder %s52, %s53
      %p67 = scmp.eq.s32.totalorder %s31, 1
      %p68 = por %p66, %p67
      %p70 = scmp.ne.s32.totalorder %s53, %s69
      %p71 = scmp.eq.s32.totalorder %s31, 0
      %p72 = por %p70, %p71
      %s74 = sadd.s32 %s73, 1
      %p77 = scmp.eq.s32.totalorder %s25, 1
      %p78 = scmp.ne.s32.totalorder %s73, %s75
      %p79 = scmp.eq.s32.totalorder %s25, 0
      %p80 = por %p78, %p79
      %p81 = scmp.ne.s32.totalorder %s73, %s75
      %p82 = scmp.eq.s32.totalorder %s30, 1
      %p83 = por %p81, %p82
      %p84 = scmp.ne.s32.totalorder %s75, %s76
      %p85 = scmp.eq.s32.totalorder %s30, 0
      %p86 = por %p84, %p85
      %p87 = scmp.ne.s32.totalorder %s75, %s76
      %p88 = scmp.eq.s32.totalorder %s31, 1
      %p89 = por %p87, %p88
      %p91 = scmp.ne.s32.totalorder %s76, %s90
      %p92 = scmp.eq.s32.totalorder %s31, 0
      %p93 = por %p91, %p92
      %s95 = sadd.s32 %s94, 1
      %p98 = scmp.eq.s32.totalorder %s25, 1
      %p99 = scmp.ne.s32.totalorder %s94, %s96
      %p100 = scmp.eq.s32.totalorder %s25, 0
      %p101 = por %p99, %p100
      %p102 = scmp.ne.s32.totalorder %s94, %s96
      %p103 = scmp.eq.s32.totalorder %s30, 1
      %p104 = por %p102, %p103
      %p105 = scmp.ne.s32.totalorder %s96, %s97
      %p106 = scmp.eq.s32.totalorder %s30, 0
      %p107 = por %p105, %p106
      %p108 = scmp.ne.s32.totalorder %s96, %s97
      %p109 = scmp.eq.s32.totalorder %s31, 1
      %p110 = por %p108, %p109
      %p112 = scmp.ne.s32.totalorder %s97, %s111
      %p113 = scmp.eq.s32.totalorder %s31, 0
      %p114 = por %p112, %p113
      %s116 = sadd.s32 %s115, 1
      %p119 = scmp.eq.s32.totalorder %s25, 1
      %p120 = scmp.ne.s32.totalorder %s115, %s117
      %p121 = scmp.eq.s32.totalorder %s25, 0
      %p122 = por %p120, %p121
      %p123 = scmp.ne.s32.totalorder %s115, %s117
      %p124 = scmp.eq.s32.totalorder %s30, 1
      %p125 = por %p123, %p124
      %p126 = scmp.ne.s32.totalorder %s117, %s118
      %p127 = scmp.eq.s32.totalorder %s30, 0
      %p128 = por %p126, %p127
      %p129 = scmp.ne.s32.totalorder %s117, %s118
      %p130 = scmp.eq.s32.totalorder %s31, 1
      %p131 = por %p129, %p130
      %p133 = scmp.ne.s32.totalorder %s118, %s132
      %p134 = scmp.eq.s32.totalorder %s31, 0
      %p135 = por %p133, %p134
      %s137 = sadd.s32 %s136, 1
      %p140 = scmp.eq.s32.totalorder %s25, 1
      %p141 = scmp.ne.s32.totalorder %s136, %s138
      %p142 = scmp.eq.s32.totalorder %s25, 0
      %p143 = por %p141, %p142
      %p144 = scmp.ne.s32.totalorder %s136, %s138
      %p145 = scmp.eq.s32.totalorder %s30, 1
      %p146 = por %p144, %p145
      %p147 = scmp.ne.s32.totalorder %s138, %s139
      %p148 = scmp.eq.s32.totalorder %s30, 0
      %p149 = por %p147, %p148
      %p150 = scmp.ne.s32.totalorder %s138, %s139
      %p151 = scmp.eq.s32.totalorder %s31, 1
      %p152 = por %p150, %p151
      %p154 = scmp.ne.s32.totalorder %s139, %s153
      %p155 = scmp.eq.s32.totalorder %s31, 0
      %p156 = por %p154, %p155
      %s158 = sadd.s32 %s157, 1
      %p161 = scmp.eq.s32.totalorder %s25, 1
      %p162 = scmp.ne.s32.totalorder %s157, %s159
      %p163 = scmp.eq.s32.totalorder %s25, 0
      %p164 = por %p162, %p163
      %p165 = scmp.ne.s32.totalorder %s157, %s159
      %p166 = scmp.eq.s32.totalorder %s30, 1
      %p167 = por %p165, %p166
      %p168 = scmp.ne.s32.totalorder %s159, %s160
      %p169 = scmp.eq.s32.totalorder %s30, 0
      %p170 = por %p168, %p169
      %p171 = scmp.ne.s32.totalorder %s159, %s160
      %p172 = scmp.eq.s32.totalorder %s31, 1
      %p173 = por %p171, %p172
      %p175 = scmp.ne.s32.totalorder %s160, %s174
      %p176 = scmp.eq.s32.totalorder %s31, 0
      %p177 = por %p175, %p176
      %s179 = sadd.s32 %s178, 1
      %p182 = scmp.eq.s32.totalorder %s25, 1
      %p183 = scmp.ne.s32.totalorder %s178, %s180
      %p184 = scmp.eq.s32.totalorder %s25, 0
      %p185 = por %p183, %p184
      %p186 = scmp.ne.s32.totalorder %s178, %s180
      %p187 = scmp.eq.s32.totalorder %s30, 1
      %p188 = por %p186, %p187
      %p189 = scmp.ne.s32.totalorder %s180, %s181
      %p190 = scmp.eq.s32.totalorder %s30, 0
      %p191 = por %p189, %p190
      %p192 = scmp.ne.s32.totalorder %s180, %s181
      %p193 = scmp.eq.s32.totalorder %s31, 1
      %p194 = por %p192, %p193
      %p196 = scmp.ne.s32.totalorder %s181, %s195
      %p197 = scmp.eq.s32.totalorder %s31, 0
      %p198 = por %p196, %p197
      %s200 = sadd.s32 %s199, 1
      %p203 = scmp.eq.s32.totalorder %s25, 1
      %p204 = scmp.ne.s32.totalorder %s199, %s201
      %p205 = scmp.eq.s32.totalorder %s25, 0
      %p206 = por %p204, %p205
      %p207 = scmp.ne.s32.totalorder %s199, %s201
      %p208 = scmp.eq.s32.totalorder %s30, 1
      %p209 = por %p207, %p208
      %p210 = scmp.ne.s32.totalorder %s201, %s202
      %p211 = scmp.eq.s32.totalorder %s30, 0
      %p212 = por %p210, %p211
      %p213 = scmp.ne.s32.totalorder %s201, %s202
      %p214 = scmp.eq.s32.totalorder %s31, 1
      %p215 = por %p213, %p214
      %p217 = scmp.ne.s32.totalorder %s202, %s216
      %p218 = scmp.eq.s32.totalorder %s31, 0
      %p219 = por %p217, %p218
      %s221 = sadd.s32 %s220, 1
      %p224 = scmp.eq.s32.totalorder %s25, 1
      %p225 = scmp.ne.s32.totalorder %s220, %s222
      %p226 = scmp.eq.s32.totalorder %s25, 0
      %p227 = por %p225, %p226
      %p228 = scmp.ne.s32.totalorder %s220, %s222
      %p229 = scmp.eq.s32.totalorder %s30, 1
      %p230 = por %p228, %p229
      %p231 = scmp.ne.s32.totalorder %s222, %s223
      %p232 = scmp.eq.s32.totalorder %s30, 0
      %p233 = por %p231, %p232
      %p234 = scmp.ne.s32.totalorder %s222, %s223
      %p235 = scmp.eq.s32.totalorder %s31, 1
      %p236 = por %p234, %p235
      %p238 = scmp.ne.s32.totalorder %s223, %s237
      %p239 = scmp.eq.s32.totalorder %s31, 0
      %p240 = por %p238, %p239
      %s242 = sadd.s32 %s241, 1
      %p245 = scmp.eq.s32.totalorder %s25, 1
      %p246 = scmp.ne.s32.totalorder %s241, %s243
      %p247 = scmp.eq.s32.totalorder %s25, 0
      %p248 = por %p246, %p247
      %p249 = scmp.ne.s32.totalorder %s241, %s243
      %p250 = scmp.eq.s32.totalorder %s30, 1
      %p251 = por %p249, %p250
      %p252 = scmp.ne.s32.totalorder %s243, %s244
      %p253 = scmp.eq.s32.totalorder %s30, 0
      %p254 = por %p252, %p253
      %p255 = scmp.ne.s32.totalorder %s243, %s244
      %p256 = scmp.eq.s32.totalorder %s31, 1
      %p257 = por %p255, %p256
      %p259 = scmp.ne.s32.totalorder %s244, %s258
      %p260 = scmp.eq.s32.totalorder %s31, 0
      %p261 = por %p259, %p260
      %s263 = sadd.s32 %s262, 1
      %p266 = scmp.eq.s32.totalorder %s25, 1
      %p267 = scmp.ne.s32.totalorder %s262, %s264
      %p268 = scmp.eq.s32.totalorder %s25, 0
      %p269 = por %p267, %p268
      %p270 = scmp.ne.s32.totalorder %s262, %s264
      %p271 = scmp.eq.s32.totalorder %s30, 1
      %p272 = por %p270, %p271
      %p273 = scmp.ne.s32.totalorder %s264, %s265
      %p274 = scmp.eq.s32.totalorder %s30, 0
      %p275 = por %p273, %p274
      %p276 = scmp.ne.s32.totalorder %s264, %s265
      %p277 = scmp.eq.s32.totalorder %s31, 1
      %p278 = por %p276, %p277
      %p280 = scmp.ne.s32.totalorder %s265, %s279
      %p281 = scmp.eq.s32.totalorder %s31, 0
      %p282 = por %p280, %p281
      %s283 = ssub.s32 %s32, %s44
      %s284 = ssub.s32 %s33, %s40
      %s285 = sor.u32 %s283, %s284
      %p286 = scmp.eq.s32.totalorder %s285, 0
      %s288 = sadd.s32 %s287, 1
      %s289 = scalar_select %p286, %s287, %s288
      %p292 = pneg %p286
      %p293 = scmp.eq.s32.totalorder %s25, 1
      %p294 = por %p292, %p293
      %p295 = scmp.ne.s32.totalorder %s287, %s290
      %p296 = scmp.eq.s32.totalorder %s25, 0
      %p297 = por %p295, %p296
      %p298 = scmp.ne.s32.totalorder %s287, %s290
      %p299 = scmp.eq.s32.totalorder %s30, 1
      %p300 = por %p298, %p299
      %p301 = scmp.ne.s32.totalorder %s290, %s291
      %p302 = scmp.eq.s32.totalorder %s30, 0
      %p303 = por %p301, %p302
      %p304 = scmp.ne.s32.totalorder %s290, %s291
      %p305 = scmp.eq.s32.totalorder %s31, 1
      %p306 = por %p304, %p305
      %p308 = scmp.ne.s32.totalorder %s291, %s307
      %p309 = scmp.eq.s32.totalorder %s31, 0
      %p310 = por %p308, %p309
      %p311 = scmp.le.s32.totalorder 1, %s25
      %p312 = scmp.lt.s32.totalorder %s25, 3
      %p313 = pnand %p311, %p312
      %p314 = pneg %p313
      // Predicated region
      $region9: #{tpu_custom_call.1} parent=5 // pred_check
        _
      $region10: #{tpu_custom_call.1} parent=5 // pred_check_branch
        %316 = sbr.rel (%p313) target = $region12
      $region11: #{tpu_custom_call.1} parent=5 // pred_region
        %s317 = ssub.s32 %s25, 1
        // Predicated region
        $region13: #{tpu_custom_call.1} parent=11 // pred_check
          %p318 = pneg %p86
        $region14: #{tpu_custom_call.1} parent=11 // pred_check_branch
          %320 = sbr.rel (%p318) target = $region16
        $region15: #{tpu_custom_call.1} parent=11 // pred_region
          %322 = vsyncadd [#allocation6], 0
          %s324 = sshll.u32 %s1, 4
          %s325 = int_to_ptr.hbm [resolvable:$true] %s324
          %s326 = sshll.u32 [#allocation5], 4
          %s327 = int_to_ptr.vmem [resolvable:$true] %s326
          %329 = dma.hbm_to_vmem [thread:$0]  %s325, 16, %s327, [#allocation6]
        $region16: #{tpu_custom_call.1} parent=11 // pred_fallthru
          _
        // Predicated region
        $region17: #{tpu_custom_call.1} parent=11 // pred_check
          %p330 = pneg %p107
        $region18: #{tpu_custom_call.1} parent=11 // pred_check_branch
          %332 = sbr.rel (%p330) target = $region20
        $region19: #{tpu_custom_call.1} parent=11 // pred_region
          _
        $region20: #{tpu_custom_call.1} parent=11 // pred_fallthru
          _
        // Predicated region
        $region21: #{tpu_custom_call.1} parent=11 // pred_check
          %p333 = pneg %p128
        $region22: #{tpu_custom_call.1} parent=11 // pred_check_branch
          %335 = sbr.rel (%p333) target = $region24
        $region23: #{tpu_custom_call.1} parent=11 // pred_region
          %337 = vsyncadd [#allocation6], 0
          %s338 = sshll.u32 %s3, 4
          %s339 = int_to_ptr.hbm [resolvable:$true] %s338
          %s340 = sshll.u32 [#allocation7], 4
          %s341 = int_to_ptr.vmem [resolvable:$true] %s340
          %346 = dma.hbm_to_vmem [thread:$0]  %s339, 2048, %s341, [#allocation6], 128, 128, 8
        $region24: #{tpu_custom_call.1} parent=11 // pred_fallthru
          _
        // Predicated region
        $region25: #{tpu_custom_call.1} parent=11 // pred_check
          %p347 = pneg %p149
        $region26: #{tpu_custom_call.1} parent=11 // pred_check_branch
          %349 = sbr.rel (%p347) target = $region28
        $region27: #{tpu_custom_call.1} parent=11 // pred_region
          _
        $region28: #{tpu_custom_call.1} parent=11 // pred_fallthru
          _
        // Predicated region
        $region29: #{tpu_custom_call.1} parent=11 // pred_check
          %p350 = pneg %p170
        $region30: #{tpu_custom_call.1} parent=11 // pred_check_branch
          %352 = sbr.rel (%p350) target = $region32
        $region31: #{tpu_custom_call.1} parent=11 // pred_region
          %354 = vsyncadd [#allocation9], 0
          %s356 = sshll.u32 %s5, 4
          %s357 = int_to_ptr.hbm [resolvable:$true] %s356
          %s358 = sshll.u32 [#allocation8], 4
          %s359 = int_to_ptr.vmem [resolvable:$true] %s358
          %361 = dma.hbm_to_vmem [thread:$0]  %s357, 128, %s359, [#allocation9]
        $region32: #{tpu_custom_call.1} parent=11 // pred_fallthru
          _
        // Predicated region
        $region33: #{tpu_custom_call.1} parent=11 // pred_check
          %p362 = pneg %p191
        $region34: #{tpu_custom_call.1} parent=11 // pred_check_branch
          %364 = sbr.rel (%p362) target = $region36
        $region35: #{tpu_custom_call.1} parent=11 // pred_region
          _
        $region36: #{tpu_custom_call.1} parent=11 // pred_fallthru
          _
        // Predicated region
        $region37: #{tpu_custom_call.1} parent=11 // pred_check
          %p365 = pneg %p212
        $region38: #{tpu_custom_call.1} parent=11 // pred_check_branch
          %367 = sbr.rel (%p365) target = $region40
        $region39: #{tpu_custom_call.1} parent=11 // pred_region
          _
        $region40: #{tpu_custom_call.1} parent=11 // pred_fallthru
          _
        // Predicated region
        $region41: #{tpu_custom_call.1} parent=11 // pred_check
          %p368 = pneg %p233
        $region42: #{tpu_custom_call.1} parent=11 // pred_check_branch
          %370 = sbr.rel (%p368) target = $region44
        $region43: #{tpu_custom_call.1} parent=11 // pred_region
          _
        $region44: #{tpu_custom_call.1} parent=11 // pred_fallthru
          _
        // Predicated region
        $region45: #{tpu_custom_call.1} parent=11 // pred_check
          %p371 = pneg %p254
        $region46: #{tpu_custom_call.1} parent=11 // pred_check_branch
          %373 = sbr.rel (%p371) target = $region48
        $region47: #{tpu_custom_call.1} parent=11 // pred_region
          %375 = vsyncadd [#allocation9], 0
          %s376 = sshll.u32 %s9, 4
          %s377 = int_to_ptr.hbm [resolvable:$true] %s376
          %s378 = sshll.u32 [#allocation10], 4
          %s379 = int_to_ptr.vmem [resolvable:$true] %s378
          %384 = dma.hbm_to_vmem [thread:$0]  %s377, 1024, %s379, [#allocation9], 64, 64, 4
        $region48: #{tpu_custom_call.1} parent=11 // pred_fallthru
          _
        // Predicated region
        $region49: #{tpu_custom_call.1} parent=11 // pred_check
          %p385 = pneg %p275
        $region50: #{tpu_custom_call.1} parent=11 // pred_check_branch
          %387 = sbr.rel (%p385) target = $region52
        $region51: #{tpu_custom_call.1} parent=11 // pred_region
          _
        $region52: #{tpu_custom_call.1} parent=11 // pred_fallthru
          _
      $region12: #{tpu_custom_call.1} parent=5 // pred_fallthru
        _
      %p388 = scmp.lt.s32.totalorder %s25, 2
      // Predicated region
      $region53: #{tpu_custom_call.1} parent=5 // pred_check
        %p389 = pneg %p388
      $region54: #{tpu_custom_call.1} parent=5 // pred_check_branch
        %391 = sbr.rel (%p389) target = $region56
      $region55: #{tpu_custom_call.1} parent=5 // pred_region
        // Predicated region
        $region57: #{tpu_custom_call.1} parent=55 // pred_check
          %p392 = pneg %p59
        $region58: #{tpu_custom_call.1} parent=55 // pred_check_branch
          %394 = sbr.rel (%p392) target = $region60
        $region59: #{tpu_custom_call.1} parent=55 // pred_region
          %s395 = sand.u32 %s49, 1
          %s396 = scalar_lea.sflag [#allocation3], %s395
          %s397 = sand.u32 %s49, 1
          %s398 = smul.addr %s397, 32
          %s399 = scalar_lea.vmem [#allocation2], %s398
          %401 = vsyncadd %s396, 0
          %s402 = smul.addr %s33, 4
          %s403 = smul.addr %s32, 4
          %s404 = sadd.s32 %s402, %s403
          %s405 = smul.addr %s404, 8
          %s406 = scalar_lea.hbm %s0, %s405
          %s407 = sshll.u32 %s406, 4
          %s408 = int_to_ptr.hbm [resolvable:$true] %s407
          %s409 = sshll.u32 %s399, 4
          %s410 = int_to_ptr.vmem [resolvable:$true] %s409
          %415 = dma.hbm_to_vmem [thread:$0]  %s408, 512, %s410, %s396, 128, 128, 8
        $region60: #{tpu_custom_call.1} parent=55 // pred_fallthru
          _
      $region56: #{tpu_custom_call.1} parent=5 // pred_fallthru
        _
      %p416 = scmp.le.s32.totalorder 1, %s25
      %p417 = scmp.lt.s32.totalorder %s25, 3
      %p418 = pnand %p416, %p417
      %p419 = pneg %p418
      // Predicated region
      $region61: #{tpu_custom_call.1} parent=5 // pred_check
        _
      $region62: #{tpu_custom_call.1} parent=5 // pred_check_branch
        %421 = sbr.rel (%p418) target = $region64
      $region63: #{tpu_custom_call.1} parent=5 // pred_region
        %s422 = ssub.s32 %s25, 1
        %s423 = sand.u32 %s52, 1
        %s424 = scalar_lea.sflag [#allocation3], %s423
        %s425 = sand.u32 %s52, 1
        %s426 = smul.addr %s425, 32
        %s427 = scalar_lea.vmem [#allocation2], %s426
        // Predicated region
        $region65: #{tpu_custom_call.1} parent=63 // pred_check
          %p428 = pneg %p65
        $region66: #{tpu_custom_call.1} parent=63 // pred_check_branch
          %430 = sbr.rel (%p428) target = $region68
        $region67: #{tpu_custom_call.1} parent=63 // pred_region
          %432 = dma.done %s424, 512
        $region68: #{tpu_custom_call.1} parent=63 // pred_fallthru
          _
        // Predicated region
        $region69: #{tpu_custom_call.1} parent=63 // pred_check
          %p433 = pneg %p86
        $region70: #{tpu_custom_call.1} parent=63 // pred_check_branch
          %435 = sbr.rel (%p433) target = $region72
        $region71: #{tpu_custom_call.1} parent=63 // pred_region
          %437 = dma.done [#allocation6], 16
        $region72: #{tpu_custom_call.1} parent=63 // pred_fallthru
          _
        // Predicated region
        $region73: #{tpu_custom_call.1} parent=63 // pred_check
          %p438 = pneg %p128
        $region74: #{tpu_custom_call.1} parent=63 // pred_check_branch
          %440 = sbr.rel (%p438) target = $region76
        $region75: #{tpu_custom_call.1} parent=63 // pred_region
          %442 = dma.done [#allocation6], 2048
        $region76: #{tpu_custom_call.1} parent=63 // pred_fallthru
          _
        // Predicated region
        $region77: #{tpu_custom_call.1} parent=63 // pred_check
          %p443 = pneg %p170
        $region78: #{tpu_custom_call.1} parent=63 // pred_check_branch
          %445 = sbr.rel (%p443) target = $region80
        $region79: #{tpu_custom_call.1} parent=63 // pred_region
          %447 = dma.done [#allocation9], 128
        $region80: #{tpu_custom_call.1} parent=63 // pred_fallthru
          _
        // Predicated region
        $region81: #{tpu_custom_call.1} parent=63 // pred_check
          %p448 = pneg %p254
        $region82: #{tpu_custom_call.1} parent=63 // pred_check_branch
          %450 = sbr.rel (%p448) target = $region84
        $region83: #{tpu_custom_call.1} parent=63 // pred_region
          %452 = dma.done [#allocation9], 1024
        $region84: #{tpu_custom_call.1} parent=63 // pred_fallthru
          _
        %s453 = sand.u32 %s52, 1
        %s454 = scalar_lea.sflag [#allocation3], %s453
        %s455 = sand.u32 %s52, 1
        %s456 = smul.addr %s455, 32
        %s457 = scalar_lea.vmem [#allocation2], %s456
        %p458 = pneg %p65
        %p459 = pneg %p62
        %p460 = pneg %p86
        %p461 = pneg %p83
        %p462 = pneg %p107
        %p463 = pneg %p104
        %p464 = pneg %p128
        %p465 = pneg %p125
        %p466 = pneg %p149
        %p467 = pneg %p146
        %p468 = pneg %p170
        %p469 = pneg %p167
        %p470 = pneg %p191
        %p471 = pneg %p188
        %p472 = pneg %p212
        %p473 = pneg %p209
        %p474 = pneg %p233
        %p475 = pneg %p230
        %p476 = pneg %p254
        %p477 = pneg %p251
        %p478 = pneg %p275
        %p479 = pneg %p272
        %p480 = pneg %p303
        %p481 = pneg %p300
        %s482 = sand.u32 %s290, 1
        %s483 = scalar_lea.sflag [#allocation4], %s482
        %s484 = sand.u32 %s290, 1
        %s485 = smul.addr %s484, 16
        %s486 = scalar_lea.vmem [#allocation11], %s485
        %s487 = smul.u32 2, %s35
        %v488 = vld [vmem:[%s427] sm:$0xff]
        %v489 = vld [vmem:[%s427 + $0x8] sm:$0xff]
        %v490 = vld [vmem:[%s427 + $0x10] sm:$0xff]
        %v491 = vld [vmem:[%s427 + $0x18] sm:$0xff]
        %v492 = vlaneseq
        %v493 = vand.u32 %v492, 127
        %vm494 = vcmp.lt.s32.totalorder %v493, 32
        %495 = vadd.xlane.f32.xlu0 %v488
        %v496 = vpop.xlane.xlu0 %495
        %497 = vadd.xlane.f32.xlu0 %v489
        %v498 = vpop.xlane.xlu0 %497
        %499 = vadd.xlane.f32.xlu0 %v490
        %v500 = vpop.xlane.xlu0 %499
        %501 = vadd.xlane.f32.xlu0 %v491
        %v502 = vpop.xlane.xlu0 %501
        %v503 = vmul.f32 %v496, 0.03125
        %v504 = vmul.f32 %v498, 0.03125
        %v505 = vmul.f32 %v500, 0.03125
        %v506 = vmul.f32 %v502, 0.03125
        %v507 = vsub.f32 %v488, %v503
        %v508 = vsub.f32 %v489, %v504
        %v509 = vsub.f32 %v490, %v505
        %v510 = vsub.f32 %v491, %v506
        %v511 = vsel %vm494, 1, 0
        %vm512 = vcmp.eq.s32.totalorder %v511, 1
        %v513 = vsel %vm512, %v507, 0.0
        %v514 = vsel %vm512, %v508, 0.0
        %v515 = vsel %vm512, %v509, 0.0
        %v516 = vsel %vm512, %v510, 0.0
        %v517 = vmul.f32 %v513, %v513
        %v518 = vmul.f32 %v514, %v514
        %v519 = vmul.f32 %v515, %v515
        %v520 = vmul.f32 %v516, %v516
        %521 = vadd.xlane.f32.xlu0 %v517
        %v522 = vpop.xlane.xlu0 %521
        %523 = vadd.xlane.f32.xlu0 %v518
        %v524 = vpop.xlane.xlu0 %523
        %525 = vadd.xlane.f32.xlu0 %v519
        %v526 = vpop.xlane.xlu0 %525
        %527 = vadd.xlane.f32.xlu0 %v520
        %v528 = vpop.xlane.xlu0 %527
        %v529 = vmul.f32 %v522, 0.03125
        %v530 = vmul.f32 %v524, 0.03125
        %v531 = vmul.f32 %v526, 0.03125
        %v532 = vmul.f32 %v528, 0.03125
        %v533 = vadd.f32 %v529, 1e-05
        %v534 = vadd.f32 %v530, 1e-05
        %v535 = vadd.f32 %v531, 1e-05
        %v536 = vadd.f32 %v532, 1e-05
        %v537 = vrsqrt.pop %v533
        %v538 = vmul.f32 %v537, %v533
        %v539 = vmul.f32 %v538, %v537
        %v540 = vmul.f32 0.5, %v539
        %v541 = vsub.f32 1.5, %v540
        %v542 = vmul.f32 %v537, %v541
        %vm543 = vweird.f32 %v533
        %vm544 = vweird.f32 %v537
        %vm545 = vmor %vm543, %vm544
        %v546 = vsel %vm545, %v537, %v542
        %v547 = vrsqrt.pop %v534
        %v548 = vmul.f32 %v547, %v534
        %v549 = vmul.f32 %v548, %v547
        %v550 = vmul.f32 0.5, %v549
        %v551 = vsub.f32 1.5, %v550
        %v552 = vmul.f32 %v547, %v551
        %vm553 = vweird.f32 %v534
        %vm554 = vweird.f32 %v547
        %vm555 = vmor %vm553, %vm554
        %v556 = vsel %vm555, %v547, %v552
        %v557 = vrsqrt.pop %v535
        %v558 = vmul.f32 %v557, %v535
        %v559 = vmul.f32 %v558, %v557
        %v560 = vmul.f32 0.5, %v559
        %v561 = vsub.f32 1.5, %v560
        %v562 = vmul.f32 %v557, %v561
        %vm563 = vweird.f32 %v535
        %vm564 = vweird.f32 %v557
        %vm565 = vmor %vm563, %vm564
        %v566 = vsel %vm565, %v557, %v562
        %v567 = vrsqrt.pop %v536
        %v568 = vmul.f32 %v567, %v536
        %v569 = vmul.f32 %v568, %v567
        %v570 = vmul.f32 0.5, %v569
        %v571 = vsub.f32 1.5, %v570
        %v572 = vmul.f32 %v567, %v571
        %vm573 = vweird.f32 %v536
        %vm574 = vweird.f32 %v567
        %vm575 = vmor %vm573, %vm574
        %v576 = vsel %vm575, %v567, %v572
        %v577 = vmul.f32 %v513, %v546
        %v578 = vmul.f32 %v514, %v556
        %v579 = vmul.f32 %v515, %v566
        %v580 = vmul.f32 %v516, %v576
        %v581 = vld [vmem:[#allocation5] sm:$0x1]
        %v583 = vperm.slane %v581, 0
        %v585 = vmul.f32 %v577, %v583
        %v586 = vmul.f32 %v578, %v583
        %v587 = vmul.f32 %v579, %v583
        %v588 = vmul.f32 %v580, %v583
        %v589 = vld [vmem:[%s2] sm:$0x1]
        %v591 = vperm.slane %v589, 0
        %v593 = vadd.f32 %v585, %v591
        %v594 = vadd.f32 %v586, %v591
        %v595 = vadd.f32 %v587, %v591
        %v596 = vadd.f32 %v588, %v591
        %v597 = vpack.c.bf16 %v594, %v593
        %v598 = vpack.c.bf16 %v596, %v595
        %v599 = vld [vmem:[#allocation7] sm:$0xff]
        %v600 = vld [vmem:[#allocation7 + $0x8] sm:$0xff]
        %v601 = vld [vmem:[#allocation7 + $0x10] sm:$0xff]
        %v602 = vld [vmem:[#allocation7 + $0x18] sm:$0xff]
        %v603 = vld [vmem:[#allocation7 + $0x20] sm:$0xff]
        %v604 = vld [vmem:[#allocation7 + $0x28] sm:$0xff]
        %v605 = vld [vmem:[#allocation7 + $0x30] sm:$0xff]
        %v606 = vld [vmem:[#allocation7 + $0x38] sm:$0xff]
        %v607 = vld [vmem:[#allocation7 + $0x40] sm:$0xff]
        %v608 = vld [vmem:[#allocation7 + $0x48] sm:$0xff]
        %v609 = vld [vmem:[#allocation7 + $0x50] sm:$0xff]
        %v610 = vld [vmem:[#allocation7 + $0x58] sm:$0xff]
        %v611 = vld [vmem:[#allocation7 + $0x60] sm:$0xff]
        %v612 = vld [vmem:[#allocation7 + $0x68] sm:$0xff]
        %v613 = vld [vmem:[#allocation7 + $0x70] sm:$0xff]
        %v614 = vld [vmem:[#allocation7 + $0x78] sm:$0xff]
        %v615 = vld [vmem:[%s4] sm:$0x3]
        %v617 = vperm.slane %v615, 0
        %v618 = vperm.slane %v615, 1
        %v637 = vunpack.c.l.b16 %v599
        %v638 = vunpack.c.h.b16 %v599
        %v639 = vunpack.c.l.b16 %v600
        %v640 = vunpack.c.h.b16 %v600
        %v641 = vunpack.c.l.b16 %v601
        %v642 = vunpack.c.h.b16 %v601
        %v643 = vunpack.c.l.b16 %v602
        %v644 = vunpack.c.h.b16 %v602
        %v645 = vunpack.c.l.b16 %v603
        %v646 = vunpack.c.h.b16 %v603
        %v647 = vunpack.c.l.b16 %v604
        %v648 = vunpack.c.h.b16 %v604
        %v649 = vunpack.c.l.b16 %v605
        %v650 = vunpack.c.h.b16 %v605
        %v651 = vunpack.c.l.b16 %v606
        %v652 = vunpack.c.h.b16 %v606
        %v653 = vunpack.c.l.b16 %v607
        %v654 = vunpack.c.h.b16 %v607
        %v655 = vunpack.c.l.b16 %v608
        %v656 = vunpack.c.h.b16 %v608
        %v657 = vunpack.c.l.b16 %v609
        %v658 = vunpack.c.h.b16 %v609
        %v659 = vunpack.c.l.b16 %v610
        %v660 = vunpack.c.h.b16 %v610
        %v661 = vunpack.c.l.b16 %v611
        %v662 = vunpack.c.h.b16 %v611
        %v663 = vunpack.c.l.b16 %v612
        %v664 = vunpack.c.h.b16 %v612
        %v665 = vunpack.c.l.b16 %v613
        %v666 = vunpack.c.h.b16 %v613
        %v667 = vunpack.c.l.b16 %v614
        %v668 = vunpack.c.h.b16 %v614
        %v669 = vpack.c.b16 %v639, %v637
        %v670 = vpack.c.b16 %v640, %v638
        %v671 = vpack.c.b16 %v643, %v641
        %v672 = vpack.c.b16 %v644, %v642
        %v673 = vpack.c.b16 %v647, %v645
        %v674 = vpack.c.b16 %v648, %v646
        %v675 = vpack.c.b16 %v651, %v649
        %v676 = vpack.c.b16 %v652, %v650
        %v677 = vpack.c.b16 %v655, %v653
        %v678 = vpack.c.b16 %v656, %v654
        %v679 = vpack.c.b16 %v659, %v657
        %v680 = vpack.c.b16 %v660, %v658
        %v681 = vpack.c.b16 %v663, %v661
        %v682 = vpack.c.b16 %v664, %v662
        %v683 = vpack.c.b16 %v667, %v665
        %v684 = vpack.c.b16 %v668, %v666
        %701 = vmatpush.bf16.msra.mxu0 %v683
        %702 = vmatpush.bf16.msra.mxu0 %v681
        %703 = vmatpush.bf16.msra.mxu0 %v679
        %704 = vmatpush.bf16.msra.mxu0 %v677
        %705 = vmatpush.bf16.msra.mxu0 %v675
        %706 = vmatpush.bf16.msra.mxu0 %v673
        %707 = vmatpush.bf16.msra.mxu0 %v671
        %708 = vmatpush.bf16.msra.mxu0 %v669
        %709 = vmatmul.bf16.gmra.mxu0 %v597
        %v710 = vpop.f32.mrf.mxu0
        %v711 = vadd.f32 %v617, %v710
        %v712 = vpop.f32.mrf.mxu0
        %v713 = vadd.f32 %v617, %v712
        %714 = vmatmul.bf16.gmra.mxu0 %v598
        %v715 = vpop.f32.mrf.mxu0
        %v716 = vadd.f32 %v617, %v715
        %v717 = vpop.f32.mrf.mxu0
        %v718 = vadd.f32 %v617, %v717
        %719 = vdwg.mxu0
        %720 = vmatpush.bf16.msra.mxu0 %v684
        %721 = vmatpush.bf16.msra.mxu0 %v682
        %722 = vmatpush.bf16.msra.mxu0 %v680
        %723 = vmatpush.bf16.msra.mxu0 %v678
        %724 = vmatpush.bf16.msra.mxu0 %v676
        %725 = vmatpush.bf16.msra.mxu0 %v674
        %726 = vmatpush.bf16.msra.mxu0 %v672
        %727 = vmatpush.bf16.msra.mxu0 %v670
        %728 = vmatmul.bf16.gmra.mxu0 %v597
        %v729 = vpop.f32.mrf.mxu0
        %v730 = vadd.f32 %v618, %v729
        %v731 = vpop.f32.mrf.mxu0
        %v732 = vadd.f32 %v618, %v731
        %733 = vmatmul.bf16.gmra.mxu0 %v598
        %v734 = vpop.f32.mrf.mxu0
        %v735 = vadd.f32 %v618, %v734
        %v736 = vpop.f32.mrf.mxu0
        %v737 = vadd.f32 %v618, %v736
        %738 = vdwg.mxu0
        %v739 = vxor.u32 %v730, 2147483648
        %v740 = vxor.u32 %v732, 2147483648
        %v741 = vxor.u32 %v735, 2147483648
        %v742 = vxor.u32 %v737, 2147483648
        %v743 = vmul.f32 %v739, 1.442695
        %v744 = vpow.pop %v743
        %v745 = vmul.f32 %v740, 1.442695
        %v746 = vpow.pop %v745
        %v747 = vmul.f32 %v741, 1.442695
        %v748 = vpow.pop %v747
        %v749 = vmul.f32 %v742, 1.442695
        %v750 = vpow.pop %v749
        %v751 = vadd.f32 %v744, 1.0
        %v752 = vadd.f32 %v746, 1.0
        %v753 = vadd.f32 %v748, 1.0
        %v754 = vadd.f32 %v750, 1.0
        %v755 = vrcp.pop %v751
        %v756 = vmul.f32 %v751, %v755
        %v757 = vsub.f32 1.0, %v756
        %v758 = vmul.f32 %v755, %v757
        %v759 = vadd.f32 %v755, %v758
        %vm760 = vweird.f32 %v751
        %vm761 = vweird.f32 %v755
        %vm762 = vmor %vm760, %vm761
        %v763 = vsel %vm762, %v755, %v759
        %v764 = vand.u32 2147483647, %v751
        %vm765 = vcmp.eq.f32.partialorder %v764, 8.507059e+37
        %v766 = vand.u32 %v751, 2147483648
        %v767 = vor.u32 1.1754944e-38, %v766
        %v768 = vsel %vm765, %v767, %v763
        %v769 = vmul.f32 1.0, %v768
        %v770 = vrcp.pop %v752
        %v771 = vmul.f32 %v752, %v770
        %v772 = vsub.f32 1.0, %v771
        %v773 = vmul.f32 %v770, %v772
        %v774 = vadd.f32 %v770, %v773
        %vm775 = vweird.f32 %v752
        %vm776 = vweird.f32 %v770
        %vm777 = vmor %vm775, %vm776
        %v778 = vsel %vm777, %v770, %v774
        %v779 = vand.u32 2147483647, %v752
        %vm780 = vcmp.eq.f32.partialorder %v779, 8.507059e+37
        %v781 = vand.u32 %v752, 2147483648
        %v782 = vor.u32 1.1754944e-38, %v781
        %v783 = vsel %vm780, %v782, %v778
        %v784 = vmul.f32 1.0, %v783
        %v785 = vrcp.pop %v753
        %v786 = vmul.f32 %v753, %v785
        %v787 = vsub.f32 1.0, %v786
        %v788 = vmul.f32 %v785, %v787
        %v789 = vadd.f32 %v785, %v788
        %vm790 = vweird.f32 %v753
        %vm791 = vweird.f32 %v785
        %vm792 = vmor %vm790, %vm791
        %v793 = vsel %vm792, %v785, %v789
        %v794 = vand.u32 2147483647, %v753
        %vm795 = vcmp.eq.f32.partialorder %v794, 8.507059e+37
        %v796 = vand.u32 %v753, 2147483648
        %v797 = vor.u32 1.1754944e-38, %v796
        %v798 = vsel %vm795, %v797, %v793
        %v799 = vmul.f32 1.0, %v798
        %v800 = vrcp.pop %v754
        %v801 = vmul.f32 %v754, %v800
        %v802 = vsub.f32 1.0, %v801
        %v803 = vmul.f32 %v800, %v802
        %v804 = vadd.f32 %v800, %v803
        %vm805 = vweird.f32 %v754
        %vm806 = vweird.f32 %v800
        %vm807 = vmor %vm805, %vm806
        %v808 = vsel %vm807, %v800, %v804
        %v809 = vand.u32 2147483647, %v754
        %vm810 = vcmp.eq.f32.partialorder %v809, 8.507059e+37
        %v811 = vand.u32 %v754, 2147483648
        %v812 = vor.u32 1.1754944e-38, %v811
        %v813 = vsel %vm810, %v812, %v808
        %v814 = vmul.f32 1.0, %v813
        %v815 = vmul.f32 %v711, %v769
        %v816 = vmul.f32 %v713, %v784
        %v817 = vmul.f32 %v716, %v799
        %v818 = vmul.f32 %v718, %v814
        %s819 = smul.u32 %s35, 16
        %s820 = ssub.s32 %s819, 8
        %v821 = vlaneseq
        %v822 = vshrl.u32 %v821, 7
        %v823 = vadd.s32 %v822, 8
        %v824 = vadd.s32 %v822, 16
        %v825 = vadd.s32 %v822, 24
        %v826 = vstv %s820
        %v827 = vadd.s32 %v826, %v822
        %v828 = vadd.s32 %v826, %v823
        %v829 = vadd.s32 %v826, %v824
        %v830 = vadd.s32 %v826, %v825
        %vm831 = vcmp.ge.s32.totalorder %v827, 0
        %vm832 = vcmp.ge.s32.totalorder %v828, 0
        %vm833 = vcmp.ge.s32.totalorder %v829, 0
        %vm834 = vcmp.ge.s32.totalorder %v830, 0
        %vm835 = vcmp.lt.s32.totalorder %v827, 16
        %vm836 = vcmp.lt.s32.totalorder %v828, 16
        %vm837 = vcmp.lt.s32.totalorder %v829, 16
        %vm838 = vcmp.lt.s32.totalorder %v830, 16
        %vm839 = vmand %vm831, %vm835
        %vm840 = vmand %vm832, %vm836
        %vm841 = vmand %vm833, %vm837
        %vm842 = vmand %vm834, %vm838
        %v843 = vsel %vm839, 1, 0
        %v844 = vsel %vm840, 1, 0
        %v845 = vsel %vm841, 1, 0
        %v846 = vsel %vm842, 1, 0
        %vm847 = vcmp.eq.s32.totalorder %v843, 1
        %vm848 = vcmp.eq.s32.totalorder %v844, 1
        %vm849 = vcmp.eq.s32.totalorder %v845, 1
        %vm850 = vcmp.eq.s32.totalorder %v846, 1
        %v851 = vsel %vm847, %v815, 0.0
        %v852 = vsel %vm848, %v816, 0.0
        %v853 = vsel %vm849, %v817, 0.0
        %v854 = vsel %vm850, %v818, 0.0
        %v855 = vrot.slane %v851, 5
        %v856 = vrot.slane %v852, 5
        %v857 = vrot.slane %v853, 5
        %v858 = vrot.slane %v854, 5
        %vm859 = vcmp.lt.s32.totalorder %v822, 3
        %v860 = vsel %vm859, %v857, %v858
        %v861 = vsel %vm859, %v856, %v857
        %v862 = vsel %vm859, %v855, %v856
        %v863 = vsel %vm859, %v858, %v855
        %v864 = vld [vmem:[#allocation8] sm:$0x7f]
        %v865 = vperm.slane %v864, 0
        %v866 = vmul.f32 %v862, %v865
        %v867 = vmul.f32 %v861, %v865
        %v868 = vadd.f32 %v866, 0.0
        %v869 = vadd.f32 %v867, 0.0
        %v870 = vrot.slane %v862, 1
        %v871 = vrot.slane %v861, 1
        %v872 = vrot.slane %v860, 1
        %v873 = vrot.slane %v863, 1
        %vm874 = vcmp.lt.s32.totalorder %v822, 7
        %v875 = vsel %vm874, %v872, %v873
        %v876 = vsel %vm874, %v871, %v872
        %v877 = vsel %vm874, %v870, %v871
        %v878 = vsel %vm874, %v873, %v870
        %v879 = vperm.slane %v864, 1
        %v880 = vmul.f32 %v877, %v879
        %v881 = vmul.f32 %v876, %v879
        %v882 = vadd.f32 %v868, %v880
        %v883 = vadd.f32 %v869, %v881
        %v884 = vrot.slane %v877, 1
        %v885 = vrot.slane %v876, 1
        %v886 = vrot.slane %v875, 1
        %v887 = vrot.slane %v878, 1
        %v888 = vsel %vm874, %v886, %v887
        %v889 = vsel %vm874, %v885, %v886
        %v890 = vsel %vm874, %v884, %v885
        %v891 = vsel %vm874, %v887, %v884
        %v892 = vperm.slane %v864, 2
        %v893 = vmul.f32 %v890, %v892
        %v894 = vmul.f32 %v889, %v892
        %v895 = vadd.f32 %v882, %v893
        %v896 = vadd.f32 %v883, %v894
        %v897 = vrot.slane %v890, 1
        %v898 = vrot.slane %v889, 1
        %v899 = vrot.slane %v888, 1
        %v900 = vrot.slane %v891, 1
        %v901 = vsel %vm874, %v899, %v900
        %v902 = vsel %vm874, %v898, %v899
        %v903 = vsel %vm874, %v897, %v898
        %v904 = vsel %vm874, %v900, %v897
        %v905 = vperm.slane %v864, 3
        %v906 = vmul.f32 %v903, %v905
        %v907 = vmul.f32 %v902, %v905
        %v908 = vadd.f32 %v895, %v906
        %v909 = vadd.f32 %v896, %v907
        %v910 = vrot.slane %v903, 1
        %v911 = vrot.slane %v902, 1
        %v912 = vrot.slane %v901, 1
        %v913 = vrot.slane %v904, 1
        %v914 = vsel %vm874, %v912, %v913
        %v915 = vsel %vm874, %v911, %v912
        %v916 = vsel %vm874, %v910, %v911
        %v917 = vsel %vm874, %v913, %v910
        %v918 = vperm.slane %v864, 4
        %v919 = vmul.f32 %v916, %v918
        %v920 = vmul.f32 %v915, %v918
        %v921 = vadd.f32 %v908, %v919
        %v922 = vadd.f32 %v909, %v920
        %v923 = vrot.slane %v916, 1
        %v924 = vrot.slane %v915, 1
        %v925 = vrot.slane %v914, 1
        %v926 = vrot.slane %v917, 1
        %v927 = vsel %vm874, %v925, %v926
        %v928 = vsel %vm874, %v924, %v925
        %v929 = vsel %vm874, %v923, %v924
        %v930 = vperm.slane %v864, 5
        %v931 = vmul.f32 %v929, %v930
        %v932 = vmul.f32 %v928, %v930
        %v933 = vadd.f32 %v921, %v931
        %v934 = vadd.f32 %v922, %v932
        %v935 = vrot.slane %v929, 1
        %v936 = vrot.slane %v928, 1
        %v937 = vrot.slane %v927, 1
        %v938 = vsel %vm874, %v936, %v937
        %v939 = vsel %vm874, %v935, %v936
        %v940 = vperm.slane %v864, 6
        %v941 = vmul.f32 %v939, %v940
        %v942 = vmul.f32 %v938, %v940
        %v943 = vadd.f32 %v933, %v941
        %v944 = vadd.f32 %v934, %v942
        %v945 = vld [vmem:[%s6] sm:$0x1]
        %v947 = vperm.slane %v945, 0
        %v949 = vadd.f32 %v943, %v947
        %v950 = vadd.f32 %v944, %v947
        %v951 = vld [vmem:[%s7] sm:$0x1]
        %v953 = vperm.slane %v951, 0
        %v955 = vmul.f32 %v949, %v953
        %v956 = vmul.f32 %v950, %v953
        %v957 = vld [vmem:[%s8] sm:$0x1]
        %v959 = vperm.slane %v957, 0
        %v961 = vadd.f32 %v955, %v959
        %v962 = vadd.f32 %v956, %v959
        %v963 = vxor.u32 %v961, 2147483648
        %v964 = vxor.u32 %v962, 2147483648
        %v965 = vmul.f32 %v963, 1.442695
        %v966 = vpow.pop %v965
        %v967 = vmul.f32 %v964, 1.442695
        %v968 = vpow.pop %v967
        %v969 = vadd.f32 %v966, 1.0
        %v970 = vadd.f32 %v968, 1.0
        %v971 = vrcp.pop %v969
        %v972 = vmul.f32 %v969, %v971
        %v973 = vsub.f32 1.0, %v972
        %v974 = vmul.f32 %v971, %v973
        %v975 = vadd.f32 %v971, %v974
        %vm976 = vweird.f32 %v969
        %vm977 = vweird.f32 %v971
        %vm978 = vmor %vm976, %vm977
        %v979 = vsel %vm978, %v971, %v975
        %v980 = vand.u32 2147483647, %v969
        %vm981 = vcmp.eq.f32.partialorder %v980, 8.507059e+37
        %v982 = vand.u32 %v969, 2147483648
        %v983 = vor.u32 1.1754944e-38, %v982
        %v984 = vsel %vm981, %v983, %v979
        %v985 = vmul.f32 1.0, %v984
        %v986 = vrcp.pop %v970
        %v987 = vmul.f32 %v970, %v986
        %v988 = vsub.f32 1.0, %v987
        %v989 = vmul.f32 %v986, %v988
        %v990 = vadd.f32 %v986, %v989
        %vm991 = vweird.f32 %v970
        %vm992 = vweird.f32 %v986
        %vm993 = vmor %vm991, %vm992
        %v994 = vsel %vm993, %v986, %v990
        %v995 = vand.u32 2147483647, %v970
        %vm996 = vcmp.eq.f32.partialorder %v995, 8.507059e+37
        %v997 = vand.u32 %v970, 2147483648
        %v998 = vor.u32 1.1754944e-38, %v997
        %v999 = vsel %vm996, %v998, %v994
        %v1000 = vmul.f32 1.0, %v999
        %v1001 = vmul.f32 %v961, %v985
        %v1002 = vmul.f32 %v962, %v1000
        %v1003 = vpack.c.bf16 %v1002, %v1001
        %v1004 = vld [vmem:[#allocation10] sm:$0xf]
        %v1005 = vld [vmem:[#allocation10 + $0x4] sm:$0xf]
        %v1006 = vld [vmem:[#allocation10 + $0x8] sm:$0xf]
        %v1007 = vld [vmem:[#allocation10 + $0xc] sm:$0xf]
        %v1008 = vld [vmem:[#allocation10 + $0x10] sm:$0xf]
        %v1009 = vld [vmem:[#allocation10 + $0x14] sm:$0xf]
        %v1010 = vld [vmem:[#allocation10 + $0x18] sm:$0xf]
        %v1011 = vld [vmem:[#allocation10 + $0x1c] sm:$0xf]
        %v1012 = vld [vmem:[#allocation10 + $0x20] sm:$0xf]
        %v1013 = vld [vmem:[#allocation10 + $0x24] sm:$0xf]
        %v1014 = vld [vmem:[#allocation10 + $0x28] sm:$0xf]
        %v1015 = vld [vmem:[#allocation10 + $0x2c] sm:$0xf]
        %v1016 = vld [vmem:[#allocation10 + $0x30] sm:$0xf]
        %v1017 = vld [vmem:[#allocation10 + $0x34] sm:$0xf]
        %v1018 = vld [vmem:[#allocation10 + $0x38] sm:$0xf]
        %v1019 = vld [vmem:[#allocation10 + $0x3c] sm:$0xf]
        %v1020 = vld [vmem:[%s10] sm:$0x1]
        %v1022 = vperm.slane %v1020, 0
        %v1040 = vunpack.c.l.b16 %v1004
        %v1041 = vunpack.c.l.b16 %v1005
        %v1042 = vunpack.c.l.b16 %v1006
        %v1043 = vunpack.c.l.b16 %v1007
        %v1044 = vunpack.c.l.b16 %v1008
        %v1045 = vunpack.c.l.b16 %v1009
        %v1046 = vunpack.c.l.b16 %v1010
        %v1047 = vunpack.c.l.b16 %v1011
        %v1048 = vunpack.c.l.b16 %v1012
        %v1049 = vunpack.c.l.b16 %v1013
        %v1050 = vunpack.c.l.b16 %v1014
        %v1051 = vunpack.c.l.b16 %v1015
        %v1052 = vunpack.c.l.b16 %v1016
        %v1053 = vunpack.c.l.b16 %v1017
        %v1054 = vunpack.c.l.b16 %v1018
        %v1055 = vunpack.c.l.b16 %v1019
        %v1056 = vpack.c.b16 %v1041, %v1040
        %v1057 = vpack.c.b16 %v1043, %v1042
        %v1058 = vpack.c.b16 %v1045, %v1044
        %v1059 = vpack.c.b16 %v1047, %v1046
        %v1060 = vpack.c.b16 %v1049, %v1048
        %v1061 = vpack.c.b16 %v1051, %v1050
        %v1062 = vpack.c.b16 %v1053, %v1052
        %v1063 = vpack.c.b16 %v1055, %v1054
        %1072 = vmatpush.bf16.msra.mxu0 %v1063
        %1073 = vmatpush.bf16.msra.mxu0 %v1062
        %1074 = vmatpush.bf16.msra.mxu0 %v1061
        %1075 = vmatpush.bf16.msra.mxu0 %v1060
        %1076 = vmatpush.bf16.msra.mxu0 %v1059
        %1077 = vmatpush.bf16.msra.mxu0 %v1058
        %1078 = vmatpush.bf16.msra.mxu0 %v1057
        %1079 = vmatpush.bf16.msra.mxu0 %v1056
        %1080 = vmatmul.bf16.gmra.mxu0 %v1003
        %v1081 = vpop.f32.mrf.mxu0
        %v1082 = vadd.f32 %v1022, %v1081
        %v1083 = vpop.f32.mrf.mxu0
        %v1084 = vadd.f32 %v1022, %v1083
        %1085 = vdwg.mxu0
        %1086 = vst [vmem:[%s486] sm:$0xff] %v1082
        %1087 = vst [vmem:[%s486 + $0x8] sm:$0xff] %v1084
        %s1088 = sand.u32 %s290, 1
        %s1089 = scalar_lea.sflag [#allocation4], %s1088
        %s1090 = sand.u32 %s290, 1
        %s1091 = smul.addr %s1090, 16
        %s1092 = scalar_lea.vmem [#allocation11], %s1091
        // Predicated region
        $region85: #{tpu_custom_call.1} parent=63 // pred_check
          %p1093 = pneg %p300
        $region86: #{tpu_custom_call.1} parent=63 // pred_check_branch
          %1095 = sbr.rel (%p1093) target = $region88
        $region87: #{tpu_custom_call.1} parent=63 // pred_region
          %s1096 = smul.u32 2, %s35
          %1098 = vsyncadd %s1089, 0
          %s1099 = smul.addr %s34, 2
          %s1100 = sadd.s32 %s1096, %s1099
          %s1101 = smul.addr %s1100, 8
          %s1102 = scalar_lea.hbm %s11, %s1101
          %s1103 = sshll.u32 %s1092, 4
          %s1104 = int_to_ptr.vmem [resolvable:$true] %s1103
          %s1105 = sshll.u32 %s1102, 4
          %s1106 = int_to_ptr.hbm [resolvable:$true] %s1105
          %1111 = dma.vmem_to_hbm [thread:$0]  %s1104, 256, %s1106, %s1089, 128, 128, 8
        $region88: #{tpu_custom_call.1} parent=63 // pred_fallthru
          _
      $region64: #{tpu_custom_call.1} parent=5 // pred_fallthru
        _
      %p1112 = scmp.le.s32.totalorder 2, %s25
      // Predicated region
      $region89: #{tpu_custom_call.1} parent=5 // pred_check
        %p1113 = pneg %p1112
      $region90: #{tpu_custom_call.1} parent=5 // pred_check_branch
        %1115 = sbr.rel (%p1113) target = $region92
      $region91: #{tpu_custom_call.1} parent=5 // pred_region
        %s1116 = ssub.s32 %s25, 2
        // Predicated region
        $region93: #{tpu_custom_call.1} parent=91 // pred_check
          %p1117 = pneg %p306
        $region94: #{tpu_custom_call.1} parent=91 // pred_check_branch
          %1119 = sbr.rel (%p1117) target = $region96
        $region95: #{tpu_custom_call.1} parent=91 // pred_region
          %s1120 = sand.u32 %s291, 1
          %s1121 = scalar_lea.sflag [#allocation4], %s1120
          %s1122 = sand.u32 %s291, 1
          %s1123 = smul.addr %s1122, 16
          %s1124 = scalar_lea.vmem [#allocation11], %s1123
          %1126 = dma.done %s1121, 256
        $region96: #{tpu_custom_call.1} parent=91 // pred_fallthru
          _
      $region92: #{tpu_custom_call.1} parent=5 // pred_fallthru
        _
    $region6: #{tpu_custom_call.1} parent=1 // loop_footer
      %s29 = sadd.s32 1, %s25
    $region7: #{tpu_custom_call.1} parent=1 // loop_footer_branch
      %24 = sbr.rel target = $region3
    $region8: #{tpu_custom_call.1} parent=1 // loop_exit
      _
    %1127 = vsyncpa [#allocation3], 1
    %s1128 = scalar_lea.sflag [#allocation3], 1
    %1129 = vsyncpa %s1128, 1
    %1130 = vsyncpa [#allocation6], 1
    %1131 = vsyncpa [#allocation9], 1
    %1132 = vsyncpa [#allocation4], 1
    %s1133 = scalar_lea.sflag [#allocation4], 1
    %1134 = vsyncpa %s1133, 1

// kernel: tpu_custom_call.1
$region0: #{tpu_custom_call.1}
  #allocation0 [shape = 'u32[]', space=smem, size = 0x4, offset = 0x4, fixed_abs, tag = 'smem constant byte address 0x4 - core index']
  #allocation1 [shape = 'u32[72,128]{1,0:T(1,128)}', space=vmem, size = 0x9000, scoped, tag = 'internal scratch']
  %s0 = inlined_call_operand.hbm [shape: f32[2,1,32,128], index: 0, kind: input, shape index: {}]
  %s1 = inlined_call_operand.hbm [shape: f32[1,128], index: 1, kind: input, shape index: {}]
  %s2 = inlined_call_operand.vmem [shape: f32[1,128], index: 2, kind: input, shape index: {}]
  %s3 = inlined_call_operand.hbm [shape: bf16[128,256], index: 3, kind: input, shape index: {}]
  %s4 = inlined_call_operand.vmem [shape: f32[1,256], index: 4, kind: input, shape index: {}]
  %s5 = inlined_call_operand.hbm [shape: f32[7,128], index: 5, kind: input, shape index: {}]
  %s6 = inlined_call_operand.vmem [shape: f32[1,128], index: 6, kind: input, shape index: {}]
  %s7 = inlined_call_operand.vmem [shape: f32[1,128], index: 7, kind: input, shape index: {}]
  %s8 = inlined_call_operand.vmem [shape: f32[1,128], index: 8, kind: input, shape index: {}]
  %s9 = inlined_call_operand.hbm [shape: bf16[128,128], index: 9, kind: input, shape index: {}]
  %s10 = inlined_call_operand.vmem [shape: f32[1,128], index: 10, kind: input, shape index: {}]
  %s11 = inlined_call_operand.hbm [shape: f32[2,16,128], index: 11, kind: output, shape index: {}]
  %s12 = sld [smem:[#allocation0]]
  $region97: #{tpu_custom_call.1} parent=0
    _
  %s14 = ssub.s32 1, %s12
  %s15 = scalar_select 0, %s14, %s12
  $region1: #{tpu_custom_call.1} parent=0
    #allocation2 [shape = 'u8[32768]{0}', space=vmem, size = 0x8000, scoped, tag = 'input window, operand 0']
    #allocation3 [shape = 's32[2]{0}', space=sflag, size = 0x8, scoped, tag = 'scoped memory for tpu_custom_call.1']
    #allocation4 [shape = 's32[2]{0}', space=sflag, size = 0x8, scoped, tag = 'scoped memory for tpu_custom_call.1']
    #allocation5 [shape = 'u8[512]{0}', space=vmem, size = 0x400, scoped, tag = 'input window, operand 1, single buffered']
    #allocation6 [shape = 's32[1]{0}', space=sflag, size = 0x4, scoped, tag = 'scoped memory for tpu_custom_call.1']
    #allocation7 [shape = 'u8[65536]{0}', space=vmem, size = 0x10000, scoped, tag = 'input window, operand 3, single buffered']
    #allocation8 [shape = 'u8[4096]{0}', space=vmem, size = 0x1000, scoped, tag = 'input window, operand 5, single buffered']
    #allocation9 [shape = 's32[1]{0}', space=sflag, size = 0x4, scoped, tag = 'scoped memory for tpu_custom_call.1']
    #allocation10 [shape = 'u8[32768]{0}', space=vmem, size = 0x8000, scoped, tag = 'input window, operand 9, single buffered']
    #allocation11 [shape = 'u8[16384]{0}', space=vmem, size = 0x4000, scoped, tag = 'output window, operand 0']
    %16 = vsyncpa [#allocation3], 0
    %s17 = scalar_lea.sflag [#allocation3], 1
    %18 = vsyncpa %s17, 0
    %19 = vsyncpa [#allocation6], 0
    %20 = vsyncpa [#allocation9], 0
    %21 = vsyncpa [#allocation4], 0
    %s22 = scalar_lea.sflag [#allocation4], 1
    %23 = vsyncpa %s22, 0
    loop: start=0, step=1, limit=4
    $region2: #{tpu_custom_call.1} parent=1 // loop_pre_header
      _
    $region3: #{tpu_custom_call.1} parent=1 // loop_header
      %s25 = sphi 0, %s29
      %p26 = scmp.ge.s32.totalorder %s25, 4
      %s32 = sphi 0, %s44
      %s33 = sphi 0, %s40
      %s34 = sphi 0, %s32
      %s35 = sphi 0, %s33
      %s36 = sphi 0, %s34
      %s37 = sphi 0, %s35
      %s49 = sphi 0, %s51
      %s52 = sphi 0, %s49
      %s53 = sphi 0, %s52
      %s69 = sphi 0, %s53
      %s73 = sphi 0, %s73
      %s75 = sphi 0, %s73
      %s76 = sphi 0, %s75
      %s90 = sphi 0, %s76
      %s94 = sphi 0, %s94
      %s96 = sphi 0, %s94
      %s97 = sphi 0, %s96
      %s111 = sphi 0, %s97
      %s115 = sphi 0, %s115
      %s117 = sphi 0, %s115
      %s118 = sphi 0, %s117
      %s132 = sphi 0, %s118
      %s136 = sphi 0, %s136
      %s138 = sphi 0, %s136
      %s139 = sphi 0, %s138
      %s153 = sphi 0, %s139
      %s157 = sphi 0, %s157
      %s159 = sphi 0, %s157
      %s160 = sphi 0, %s159
      %s174 = sphi 0, %s160
      %s178 = sphi 0, %s178
      %s180 = sphi 0, %s178
      %s181 = sphi 0, %s180
      %s195 = sphi 0, %s181
      %s199 = sphi 0, %s199
      %s201 = sphi 0, %s199
      %s202 = sphi 0, %s201
      %s216 = sphi 0, %s202
      %s220 = sphi 0, %s220
      %s222 = sphi 0, %s220
      %s223 = sphi 0, %s222
      %s237 = sphi 0, %s223
      %s241 = sphi 0, %s241
      %s243 = sphi 0, %s241
      %s244 = sphi 0, %s243
      %s258 = sphi 0, %s244
      %s262 = sphi 0, %s262
      %s264 = sphi 0, %s262
      %s265 = sphi 0, %s264
      %s279 = sphi 0, %s265
      %s287 = sphi 0, %s289
      %s290 = sphi 0, %s287
      %s291 = sphi 0, %s290
      %s307 = sphi 0, %s291
    $region4: #{tpu_custom_call.1} parent=1 // loop_header_branch
      %28 = sbr.rel (%p26) target = $region8
    $region5: #{tpu_custom_call.1} parent=1 // loop_body
      %s30 = ssub.s32 %s25, 1
      %s31 = ssub.s32 %s25, 2
      %s38 = sadd.s32 1, %s33
      %p39 = scmp.ge.s32.totalorder %s38, 1
      %s40 = scalar_select %p39, 0, %s38
      %s41 = sadd.s32 1, %s32
      %s42 = scalar_select %p39, %s41, %s32
      %p43 = scmp.ge.s32.totalorder %s42, 2
      %s44 = scalar_select %p43, 0, %s42
      %s45 = ssub.s32 %s32, %s44
      %s46 = ssub.s32 %s33, %s40
      %s47 = sor.u32 %s45, %s46
      %p48 = scmp.eq.s32.totalorder %s47, 0
      %s50 = sadd.s32 %s49, 1
      %s51 = scalar_select %p48, %s49, %s50
      %p54 = pneg %p48
      %p55 = scmp.eq.s32.totalorder %s25, 1
      %p56 = por %p54, %p55
      %p57 = scmp.ne.s32.totalorder %s49, %s52
      %p58 = scmp.eq.s32.totalorder %s25, 0
      %p59 = por %p57, %p58
      %p60 = scmp.ne.s32.totalorder %s49, %s52
      %p61 = scmp.eq.s32.totalorder %s30, 1
      %p62 = por %p60, %p61
      %p63 = scmp.ne.s32.totalorder %s52, %s53
      %p64 = scmp.eq.s32.totalorder %s30, 0
      %p65 = por %p63, %p64
      %p66 = scmp.ne.s32.totalorder %s52, %s53
      %p67 = scmp.eq.s32.totalorder %s31, 1
      %p68 = por %p66, %p67
      %p70 = scmp.ne.s32.totalorder %s53, %s69
      %p71 = scmp.eq.s32.totalorder %s31, 0
      %p72 = por %p70, %p71
      %s74 = sadd.s32 %s73, 1
      %p77 = scmp.eq.s32.totalorder %s25, 1
      %p78 = scmp.ne.s32.totalorder %s73, %s75
      %p79 = scmp.eq.s32.totalorder %s25, 0
      %p80 = por %p78, %p79
      %p81 = scmp.ne.s32.totalorder %s73, %s75
      %p82 = scmp.eq.s32.totalorder %s30, 1
      %p83 = por %p81, %p82
      %p84 = scmp.ne.s32.totalorder %s75, %s76
      %p85 = scmp.eq.s32.totalorder %s30, 0
      %p86 = por %p84, %p85
      %p87 = scmp.ne.s32.totalorder %s75, %s76
      %p88 = scmp.eq.s32.totalorder %s31, 1
      %p89 = por %p87, %p88
      %p91 = scmp.ne.s32.totalorder %s76, %s90
      %p92 = scmp.eq.s32.totalorder %s31, 0
      %p93 = por %p91, %p92
      %s95 = sadd.s32 %s94, 1
      %p98 = scmp.eq.s32.totalorder %s25, 1
      %p99 = scmp.ne.s32.totalorder %s94, %s96
      %p100 = scmp.eq.s32.totalorder %s25, 0
      %p101 = por %p99, %p100
      %p102 = scmp.ne.s32.totalorder %s94, %s96
      %p103 = scmp.eq.s32.totalorder %s30, 1
      %p104 = por %p102, %p103
      %p105 = scmp.ne.s32.totalorder %s96, %s97
      %p106 = scmp.eq.s32.totalorder %s30, 0
      %p107 = por %p105, %p106
      %p108 = scmp.ne.s32.totalorder %s96, %s97
      %p109 = scmp.eq.s32.totalorder %s31, 1
      %p110 = por %p108, %p109
      %p112 = scmp.ne.s32.totalorder %s97, %s111
      %p113 = scmp.eq.s32.totalorder %s31, 0
      %p114 = por %p112, %p113
      %s116 = sadd.s32 %s115, 1
      %p119 = scmp.eq.s32.totalorder %s25, 1
      %p120 = scmp.ne.s32.totalorder %s115, %s117
      %p121 = scmp.eq.s32.totalorder %s25, 0
      %p122 = por %p120, %p121
      %p123 = scmp.ne.s32.totalorder %s115, %s117
      %p124 = scmp.eq.s32.totalorder %s30, 1
      %p125 = por %p123, %p124
      %p126 = scmp.ne.s32.totalorder %s117, %s118
      %p127 = scmp.eq.s32.totalorder %s30, 0
      %p128 = por %p126, %p127
      %p129 = scmp.ne.s32.totalorder %s117, %s118
      %p130 = scmp.eq.s32.totalorder %s31, 1
      %p131 = por %p129, %p130
      %p133 = scmp.ne.s32.totalorder %s118, %s132
      %p134 = scmp.eq.s32.totalorder %s31, 0
      %p135 = por %p133, %p134
      %s137 = sadd.s32 %s136, 1
      %p140 = scmp.eq.s32.totalorder %s25, 1
      %p141 = scmp.ne.s32.totalorder %s136, %s138
      %p142 = scmp.eq.s32.totalorder %s25, 0
      %p143 = por %p141, %p142
      %p144 = scmp.ne.s32.totalorder %s136, %s138
      %p145 = scmp.eq.s32.totalorder %s30, 1
      %p146 = por %p144, %p145
      %p147 = scmp.ne.s32.totalorder %s138, %s139
      %p148 = scmp.eq.s32.totalorder %s30, 0
      %p149 = por %p147, %p148
      %p150 = scmp.ne.s32.totalorder %s138, %s139
      %p151 = scmp.eq.s32.totalorder %s31, 1
      %p152 = por %p150, %p151
      %p154 = scmp.ne.s32.totalorder %s139, %s153
      %p155 = scmp.eq.s32.totalorder %s31, 0
      %p156 = por %p154, %p155
      %s158 = sadd.s32 %s157, 1
      %p161 = scmp.eq.s32.totalorder %s25, 1
      %p162 = scmp.ne.s32.totalorder %s157, %s159
      %p163 = scmp.eq.s32.totalorder %s25, 0
      %p164 = por %p162, %p163
      %p165 = scmp.ne.s32.totalorder %s157, %s159
      %p166 = scmp.eq.s32.totalorder %s30, 1
      %p167 = por %p165, %p166
      %p168 = scmp.ne.s32.totalorder %s159, %s160
      %p169 = scmp.eq.s32.totalorder %s30, 0
      %p170 = por %p168, %p169
      %p171 = scmp.ne.s32.totalorder %s159, %s160
      %p172 = scmp.eq.s32.totalorder %s31, 1
      %p173 = por %p171, %p172
      %p175 = scmp.ne.s32.totalorder %s160, %s174
      %p176 = scmp.eq.s32.totalorder %s31, 0
      %p177 = por %p175, %p176
      %s179 = sadd.s32 %s178, 1
      %p182 = scmp.eq.s32.totalorder %s25, 1
      %p183 = scmp.ne.s32.totalorder %s178, %s180
      %p184 = scmp.eq.s32.totalorder %s25, 0
      %p185 = por %p183, %p184
      %p186 = scmp.ne.s32.totalorder %s178, %s180
      %p187 = scmp.eq.s32.totalorder %s30, 1
      %p188 = por %p186, %p187
      %p189 = scmp.ne.s32.totalorder %s180, %s181
      %p190 = scmp.eq.s32.totalorder %s30, 0
      %p191 = por %p189, %p190
      %p192 = scmp.ne.s32.totalorder %s180, %s181
      %p193 = scmp.eq.s32.totalorder %s31, 1
      %p194 = por %p192, %p193
      %p196 = scmp.ne.s32.totalorder %s181, %s195
      %p197 = scmp.eq.s32.totalorder %s31, 0
      %p198 = por %p196, %p197
      %s200 = sadd.s32 %s199, 1
      %p203 = scmp.eq.s32.totalorder %s25, 1
      %p204 = scmp.ne.s32.totalorder %s199, %s201
      %p205 = scmp.eq.s32.totalorder %s25, 0
      %p206 = por %p204, %p205
      %p207 = scmp.ne.s32.totalorder %s199, %s201
      %p208 = scmp.eq.s32.totalorder %s30, 1
      %p209 = por %p207, %p208
      %p210 = scmp.ne.s32.totalorder %s201, %s202
      %p211 = scmp.eq.s32.totalorder %s30, 0
      %p212 = por %p210, %p211
      %p213 = scmp.ne.s32.totalorder %s201, %s202
      %p214 = scmp.eq.s32.totalorder %s31, 1
      %p215 = por %p213, %p214
      %p217 = scmp.ne.s32.totalorder %s202, %s216
      %p218 = scmp.eq.s32.totalorder %s31, 0
      %p219 = por %p217, %p218
      %s221 = sadd.s32 %s220, 1
      %p224 = scmp.eq.s32.totalorder %s25, 1
      %p225 = scmp.ne.s32.totalorder %s220, %s222
      %p226 = scmp.eq.s32.totalorder %s25, 0
      %p227 = por %p225, %p226
      %p228 = scmp.ne.s32.totalorder %s220, %s222
      %p229 = scmp.eq.s32.totalorder %s30, 1
      %p230 = por %p228, %p229
      %p231 = scmp.ne.s32.totalorder %s222, %s223
      %p232 = scmp.eq.s32.totalorder %s30, 0
      %p233 = por %p231, %p232
      %p234 = scmp.ne.s32.totalorder %s222, %s223
      %p235 = scmp.eq.s32.totalorder %s31, 1
      %p236 = por %p234, %p235
      %p238 = scmp.ne.s32.totalorder %s223, %s237
      %p239 = scmp.eq.s32.totalorder %s31, 0
      %p240 = por %p238, %p239
      %s242 = sadd.s32 %s241, 1
      %p245 = scmp.eq.s32.totalorder %s25, 1
      %p246 = scmp.ne.s32.totalorder %s241, %s243
      %p247 = scmp.eq.s32.totalorder %s25, 0
      %p248 = por %p246, %p247
      %p249 = scmp.ne.s32.totalorder %s241, %s243
      %p250 = scmp.eq.s32.totalorder %s30, 1
      %p251 = por %p249, %p250
      %p252 = scmp.ne.s32.totalorder %s243, %s244
      %p253 = scmp.eq.s32.totalorder %s30, 0
      %p254 = por %p252, %p253
      %p255 = scmp.ne.s32.totalorder %s243, %s244
      %p256 = scmp.eq.s32.totalorder %s31, 1
      %p257 = por %p255, %p256
      %p259 = scmp.ne.s32.totalorder %s244, %s258
      %p260 = scmp.eq.s32.totalorder %s31, 0
      %p261 = por %p259, %p260
      %s263 = sadd.s32 %s262, 1
      %p266 = scmp.eq.s32.totalorder %s25, 1
      %p267 = scmp.ne.s32.totalorder %s262, %s264
      %p268 = scmp.eq.s32.totalorder %s25, 0
      %p269 = por %p267, %p268
      %p270 = scmp.ne.s32.totalorder %s262, %s264
      %p271 = scmp.eq.s32.totalorder %s30, 1
      %p272 = por %p270, %p271
      %p273 = scmp.ne.s32.totalorder %s264, %s265
      %p274 = scmp.eq.s32.totalorder %s30, 0
      %p275 = por %p273, %p274
      %p276 = scmp.ne.s32.totalorder %s264, %s265
      %p277 = scmp.eq.s32.totalorder %s31, 1
      %p278 = por %p276, %p277
      %p280 = scmp.ne.s32.totalorder %s265, %s279
      %p281 = scmp.eq.s32.totalorder %s31, 0
      %p282 = por %p280, %p281
      %s283 = ssub.s32 %s32, %s44
      %s284 = ssub.s32 %s33, %s40
      %s285 = sor.u32 %s283, %s284
      %p286 = scmp.eq.s32.totalorder %s285, 0
      %s288 = sadd.s32 %s287, 1
      %s289 = scalar_select %p286, %s287, %s288
      %p292 = pneg %p286
      %p293 = scmp.eq.s32.totalorder %s25, 1
      %p294 = por %p292, %p293
      %p295 = scmp.ne.s32.totalorder %s287, %s290
      %p296 = scmp.eq.s32.totalorder %s25, 0
      %p297 = por %p295, %p296
      %p298 = scmp.ne.s32.totalorder %s287, %s290
      %p299 = scmp.eq.s32.totalorder %s30, 1
      %p300 = por %p298, %p299
      %p301 = scmp.ne.s32.totalorder %s290, %s291
      %p302 = scmp.eq.s32.totalorder %s30, 0
      %p303 = por %p301, %p302
      %p304 = scmp.ne.s32.totalorder %s290, %s291
      %p305 = scmp.eq.s32.totalorder %s31, 1
      %p306 = por %p304, %p305
      %p308 = scmp.ne.s32.totalorder %s291, %s307
      %p309 = scmp.eq.s32.totalorder %s31, 0
      %p310 = por %p308, %p309
      %p311 = scmp.le.s32.totalorder 1, %s25
      %p312 = scmp.lt.s32.totalorder %s25, 3
      %p313 = pnand %p311, %p312
      %p314 = pneg %p313
      // Predicated region
      $region9: #{tpu_custom_call.1} parent=5 // pred_check
        _
      $region10: #{tpu_custom_call.1} parent=5 // pred_check_branch
        %316 = sbr.rel (%p313) target = $region12
      $region11: #{tpu_custom_call.1} parent=5 // pred_region
        %s317 = ssub.s32 %s25, 1
        // Predicated region
        $region13: #{tpu_custom_call.1} parent=11 // pred_check
          %p318 = pneg %p86
        $region14: #{tpu_custom_call.1} parent=11 // pred_check_branch
          %320 = sbr.rel (%p318) target = $region16
        $region15: #{tpu_custom_call.1} parent=11 // pred_region
          %322 = vsyncadd [#allocation6], 0
          %s324 = sshll.u32 %s1, 4
          %s325 = int_to_ptr.hbm [resolvable:$true] %s324
          %s326 = sshll.u32 [#allocation5], 4
          %s327 = int_to_ptr.vmem [resolvable:$true] %s326
          %329 = dma.hbm_to_vmem [thread:$0]  %s325, 16, %s327, [#allocation6]
        $region16: #{tpu_custom_call.1} parent=11 // pred_fallthru
          _
        // Predicated region
        $region17: #{tpu_custom_call.1} parent=11 // pred_check
          %p330 = pneg %p107
        $region18: #{tpu_custom_call.1} parent=11 // pred_check_branch
          %332 = sbr.rel (%p330) target = $region20
        $region19: #{tpu_custom_call.1} parent=11 // pred_region
          _
        $region20: #{tpu_custom_call.1} parent=11 // pred_fallthru
          _
        // Predicated region
        $region21: #{tpu_custom_call.1} parent=11 // pred_check
          %p333 = pneg %p128
        $region22: #{tpu_custom_call.1} parent=11 // pred_check_branch
          %335 = sbr.rel (%p333) target = $region24
        $region23: #{tpu_custom_call.1} parent=11 // pred_region
          %337 = vsyncadd [#allocation6], 0
          %s338 = sshll.u32 %s3, 4
          %s339 = int_to_ptr.hbm [resolvable:$true] %s338
          %s340 = sshll.u32 [#allocation7], 4
          %s341 = int_to_ptr.vmem [resolvable:$true] %s340
          %346 = dma.hbm_to_vmem [thread:$0]  %s339, 2048, %s341, [#allocation6], 128, 128, 8
        $region24: #{tpu_custom_call.1} parent=11 // pred_fallthru
          _
        // Predicated region
        $region25: #{tpu_custom_call.1} parent=11 // pred_check
          %p347 = pneg %p149
        $region26: #{tpu_custom_call.1} parent=11 // pred_check_branch
          %349 = sbr.rel (%p347) target = $region28
        $region27: #{tpu_custom_call.1} parent=11 // pred_region
          _
        $region28: #{tpu_custom_call.1} parent=11 // pred_fallthru
          _
        // Predicated region
        $region29: #{tpu_custom_call.1} parent=11 // pred_check
          %p350 = pneg %p170
        $region30: #{tpu_custom_call.1} parent=11 // pred_check_branch
          %352 = sbr.rel (%p350) target = $region32
        $region31: #{tpu_custom_call.1} parent=11 // pred_region
          %354 = vsyncadd [#allocation9], 0
          %s356 = sshll.u32 %s5, 4
          %s357 = int_to_ptr.hbm [resolvable:$true] %s356
          %s358 = sshll.u32 [#allocation8], 4
          %s359 = int_to_ptr.vmem [resolvable:$true] %s358
          %361 = dma.hbm_to_vmem [thread:$0]  %s357, 128, %s359, [#allocation9]
        $region32: #{tpu_custom_call.1} parent=11 // pred_fallthru
          _
        // Predicated region
        $region33: #{tpu_custom_call.1} parent=11 // pred_check
          %p362 = pneg %p191
        $region34: #{tpu_custom_call.1} parent=11 // pred_check_branch
          %364 = sbr.rel (%p362) target = $region36
        $region35: #{tpu_custom_call.1} parent=11 // pred_region
          _
        $region36: #{tpu_custom_call.1} parent=11 // pred_fallthru
          _
        // Predicated region
        $region37: #{tpu_custom_call.1} parent=11 // pred_check
          %p365 = pneg %p212
        $region38: #{tpu_custom_call.1} parent=11 // pred_check_branch
          %367 = sbr.rel (%p365) target = $region40
        $region39: #{tpu_custom_call.1} parent=11 // pred_region
          _
        $region40: #{tpu_custom_call.1} parent=11 // pred_fallthru
          _
        // Predicated region
        $region41: #{tpu_custom_call.1} parent=11 // pred_check
          %p368 = pneg %p233
        $region42: #{tpu_custom_call.1} parent=11 // pred_check_branch
          %370 = sbr.rel (%p368) target = $region44
        $region43: #{tpu_custom_call.1} parent=11 // pred_region
          _
        $region44: #{tpu_custom_call.1} parent=11 // pred_fallthru
          _
        // Predicated region
        $region45: #{tpu_custom_call.1} parent=11 // pred_check
          %p371 = pneg %p254
        $region46: #{tpu_custom_call.1} parent=11 // pred_check_branch
          %373 = sbr.rel (%p371) target = $region48
        $region47: #{tpu_custom_call.1} parent=11 // pred_region
          %375 = vsyncadd [#allocation9], 0
          %s376 = sshll.u32 %s9, 4
          %s377 = int_to_ptr.hbm [resolvable:$true] %s376
          %s378 = sshll.u32 [#allocation10], 4
          %s379 = int_to_ptr.vmem [resolvable:$true] %s378
          %384 = dma.hbm_to_vmem [thread:$0]  %s377, 1024, %s379, [#allocation9], 64, 64, 4
        $region48: #{tpu_custom_call.1} parent=11 // pred_fallthru
          _
        // Predicated region
        $region49: #{tpu_custom_call.1} parent=11 // pred_check
          %p385 = pneg %p275
        $region50: #{tpu_custom_call.1} parent=11 // pred_check_branch
          %387 = sbr.rel (%p385) target = $region52
        $region51: #{tpu_custom_call.1} parent=11 // pred_region
          _
        $region52: #{tpu_custom_call.1} parent=11 // pred_fallthru
          _
      $region12: #{tpu_custom_call.1} parent=5 // pred_fallthru
        _
      %p388 = scmp.lt.s32.totalorder %s25, 2
      // Predicated region
      $region53: #{tpu_custom_call.1} parent=5 // pred_check
        %p389 = pneg %p388
      $region54: #{tpu_custom_call.1} parent=5 // pred_check_branch
        %391 = sbr.rel (%p389) target = $region56
      $region55: #{tpu_custom_call.1} parent=5 // pred_region
        // Predicated region
        $region57: #{tpu_custom_call.1} parent=55 // pred_check
          %p392 = pneg %p59
        $region58: #{tpu_custom_call.1} parent=55 // pred_check_branch
          %394 = sbr.rel (%p392) target = $region60
        $region59: #{tpu_custom_call.1} parent=55 // pred_region
          %s395 = sand.u32 %s49, 1
          %s396 = scalar_lea.sflag [#allocation3], %s395
          %s397 = sand.u32 %s49, 1
          %s398 = smul.addr %s397, 32
          %s399 = scalar_lea.vmem [#allocation2], %s398
          %401 = vsyncadd %s396, 0
          %s402 = smul.addr %s33, 4
          %s403 = smul.addr %s32, 4
          %s404 = sadd.s32 %s402, %s403
          %s405 = smul.addr %s404, 8
          %s406 = scalar_lea.hbm %s0, %s405
          %s407 = sshll.u32 %s406, 4
          %s408 = int_to_ptr.hbm [resolvable:$true] %s407
          %s409 = sshll.u32 %s399, 4
          %s410 = int_to_ptr.vmem [resolvable:$true] %s409
          %415 = dma.hbm_to_vmem [thread:$0]  %s408, 512, %s410, %s396, 128, 128, 8
        $region60: #{tpu_custom_call.1} parent=55 // pred_fallthru
          _
      $region56: #{tpu_custom_call.1} parent=5 // pred_fallthru
        _
      %p416 = scmp.le.s32.totalorder 1, %s25
      %p417 = scmp.lt.s32.totalorder %s25, 3
      %p418 = pnand %p416, %p417
      %p419 = pneg %p418
      // Predicated region
      $region61: #{tpu_custom_call.1} parent=5 // pred_check
        _
      $region62: #{tpu_custom_call.1} parent=5 // pred_check_branch
        %421 = sbr.rel (%p418) target = $region64
      $region63: #{tpu_custom_call.1} parent=5 // pred_region
        %s422 = ssub.s32 %s25, 1
        %s423 = sand.u32 %s52, 1
        %s424 = scalar_lea.sflag [#allocation3], %s423
        %s425 = sand.u32 %s52, 1
        %s426 = smul.addr %s425, 32
        %s427 = scalar_lea.vmem [#allocation2], %s426
        // Predicated region
        $region65: #{tpu_custom_call.1} parent=63 // pred_check
          %p428 = pneg %p65
        $region66: #{tpu_custom_call.1} parent=63 // pred_check_branch
          %430 = sbr.rel (%p428) target = $region68
        $region67: #{tpu_custom_call.1} parent=63 // pred_region
          %432 = dma.done %s424, 512
        $region68: #{tpu_custom_call.1} parent=63 // pred_fallthru
          _
        // Predicated region
        $region69: #{tpu_custom_call.1} parent=63 // pred_check
          %p433 = pneg %p86
        $region70: #{tpu_custom_call.1} parent=63 // pred_check_branch
          %435 = sbr.rel (%p433) target = $region72
        $region71: #{tpu_custom_call.1} parent=63 // pred_region
          %437 = dma.done [#allocation6], 16
        $region72: #{tpu_custom_call.1} parent=63 // pred_fallthru
          _
        // Predicated region
        $region73: #{tpu_custom_call.1} parent=63 // pred_check
          %p438 = pneg %p128
        $region74: #{tpu_custom_call.1} parent=63 // pred_check_branch
          %440 = sbr.rel (%p438) target = $region76
        $region75: #{tpu_custom_call.1} parent=63 // pred_region
          %442 = dma.done [#allocation6], 2048
        $region76: #{tpu_custom_call.1} parent=63 // pred_fallthru
          _
        // Predicated region
        $region77: #{tpu_custom_call.1} parent=63 // pred_check
          %p443 = pneg %p170
        $region78: #{tpu_custom_call.1} parent=63 // pred_check_branch
          %445 = sbr.rel (%p443) target = $region80
        $region79: #{tpu_custom_call.1} parent=63 // pred_region
          %447 = dma.done [#allocation9], 128
        $region80: #{tpu_custom_call.1} parent=63 // pred_fallthru
          _
        // Predicated region
        $region81: #{tpu_custom_call.1} parent=63 // pred_check
          %p448 = pneg %p254
        $region82: #{tpu_custom_call.1} parent=63 // pred_check_branch
          %450 = sbr.rel (%p448) target = $region84
        $region83: #{tpu_custom_call.1} parent=63 // pred_region
          %452 = dma.done [#allocation9], 1024
        $region84: #{tpu_custom_call.1} parent=63 // pred_fallthru
          _
        %s453 = sand.u32 %s52, 1
        %s454 = scalar_lea.sflag [#allocation3], %s453
        %s455 = sand.u32 %s52, 1
        %s456 = smul.addr %s455, 32
        %s457 = scalar_lea.vmem [#allocation2], %s456
        %p458 = pneg %p65
        %p459 = pneg %p62
        %p460 = pneg %p86
        %p461 = pneg %p83
        %p462 = pneg %p107
        %p463 = pneg %p104
        %p464 = pneg %p128
        %p465 = pneg %p125
        %p466 = pneg %p149
        %p467 = pneg %p146
        %p468 = pneg %p170
        %p469 = pneg %p167
        %p470 = pneg %p191
        %p471 = pneg %p188
        %p472 = pneg %p212
        %p473 = pneg %p209
        %p474 = pneg %p233
        %p475 = pneg %p230
        %p476 = pneg %p254
        %p477 = pneg %p251
        %p478 = pneg %p275
        %p479 = pneg %p272
        %p480 = pneg %p303
        %p481 = pneg %p300
        %s482 = sand.u32 %s290, 1
        %s483 = scalar_lea.sflag [#allocation4], %s482
        %s484 = sand.u32 %s290, 1
        %s485 = smul.addr %s484, 16
        %s486 = scalar_lea.vmem [#allocation11], %s485
        %s487 = smul.u32 2, %s35
        %v488 = vld [vmem:[%s427] sm:$0xff]
        %v489 = vld [vmem:[%s427 + $0x8] sm:$0xff]
        %v490 = vld [vmem:[%s427 + $0x10] sm:$0xff]
        %v491 = vld [vmem:[%s427 + $0x18] sm:$0xff]
        %v492 = vlaneseq
        %v493 = vand.u32 %v492, 127
        %vm494 = vcmp.lt.s32.totalorder %v493, 32
        %495 = vadd.xlane.f32.xlu0 %v488
        %v496 = vpop.xlane.xlu0 %495
        %497 = vadd.xlane.f32.xlu0 %v489
        %v498 = vpop.xlane.xlu0 %497
        %499 = vadd.xlane.f32.xlu0 %v490
        %v500 = vpop.xlane.xlu0 %499
        %501 = vadd.xlane.f32.xlu0 %v491
        %v502 = vpop.xlane.xlu0 %501
        %v503 = vmul.f32 %v496, 0.03125
        %v504 = vmul.f32 %v498, 0.03125
        %v505 = vmul.f32 %v500, 0.03125
        %v506 = vmul.f32 %v502, 0.03125
        %v507 = vsub.f32 %v488, %v503
        %v508 = vsub.f32 %v489, %v504
        %v509 = vsub.f32 %v490, %v505
        %v510 = vsub.f32 %v491, %v506
        %v511 = vsel %vm494, 1, 0
        %vm512 = vcmp.eq.s32.totalorder %v511, 1
        %v513 = vsel %vm512, %v507, 0.0
        %v514 = vsel %vm512, %v508, 0.0
        %v515 = vsel %vm512, %v509, 0.0
        %v516 = vsel %vm512, %v510, 0.0
        %v517 = vmul.f32 %v513, %v513
        %v518 = vmul.f32 %v514, %v514
        %v519 = vmul.f32 %v515, %v515
        %v520 = vmul.f32 %v516, %v516
        %521 = vadd.xlane.f32.xlu0 %v517
        %v522 = vpop.xlane.xlu0 %521
        %523 = vadd.xlane.f32.xlu0 %v518
        %v524 = vpop.xlane.xlu0 %523
        %525 = vadd.xlane.f32.xlu0 %v519
        %v526 = vpop.xlane.xlu0 %525
        %527 = vadd.xlane.f32.xlu0 %v520
        %v528 = vpop.xlane.xlu0 %527
        %v529 = vmul.f32 %v522, 0.03125
        %v530 = vmul.f32 %v524, 0.03125
        %v531 = vmul.f32 %v526, 0.03125
        %v532 = vmul.f32 %v528, 0.03125
        %v533 = vadd.f32 %v529, 1e-05
        %v534 = vadd.f32 %v530, 1e-05
        %v535 = vadd.f32 %v531, 1e-05
        %v536 = vadd.f32 %v532, 1e-05
        %v537 = vrsqrt.pop %v533
        %v538 = vmul.f32 %v537, %v533
        %v539 = vmul.f32 %v538, %v537
        %v540 = vmul.f32 0.5, %v539
        %v541 = vsub.f32 1.5, %v540
        %v542 = vmul.f32 %v537, %v541
        %vm543 = vweird.f32 %v533
        %vm544 = vweird.f32 %v537
        %vm545 = vmor %vm543, %vm544
        %v546 = vsel %vm545, %v537, %v542
        %v547 = vrsqrt.pop %v534
        %v548 = vmul.f32 %v547, %v534
        %v549 = vmul.f32 %v548, %v547
        %v550 = vmul.f32 0.5, %v549
        %v551 = vsub.f32 1.5, %v550
        %v552 = vmul.f32 %v547, %v551
        %vm553 = vweird.f32 %v534
        %vm554 = vweird.f32 %v547
        %vm555 = vmor %vm553, %vm554
        %v556 = vsel %vm555, %v547, %v552
        %v557 = vrsqrt.pop %v535
        %v558 = vmul.f32 %v557, %v535
        %v559 = vmul.f32 %v558, %v557
        %v560 = vmul.f32 0.5, %v559
        %v561 = vsub.f32 1.5, %v560
        %v562 = vmul.f32 %v557, %v561
        %vm563 = vweird.f32 %v535
        %vm564 = vweird.f32 %v557
        %vm565 = vmor %vm563, %vm564
        %v566 = vsel %vm565, %v557, %v562
        %v567 = vrsqrt.pop %v536
        %v568 = vmul.f32 %v567, %v536
        %v569 = vmul.f32 %v568, %v567
        %v570 = vmul.f32 0.5, %v569
        %v571 = vsub.f32 1.5, %v570
        %v572 = vmul.f32 %v567, %v571
        %vm573 = vweird.f32 %v536
        %vm574 = vweird.f32 %v567
        %vm575 = vmor %vm573, %vm574
        %v576 = vsel %vm575, %v567, %v572
        %v577 = vmul.f32 %v513, %v546
        %v578 = vmul.f32 %v514, %v556
        %v579 = vmul.f32 %v515, %v566
        %v580 = vmul.f32 %v516, %v576
        %v581 = vld [vmem:[#allocation5] sm:$0x1]
        %v583 = vperm.slane %v581, 0
        %v585 = vmul.f32 %v577, %v583
        %v586 = vmul.f32 %v578, %v583
        %v587 = vmul.f32 %v579, %v583
        %v588 = vmul.f32 %v580, %v583
        %v589 = vld [vmem:[%s2] sm:$0x1]
        %v591 = vperm.slane %v589, 0
        %v593 = vadd.f32 %v585, %v591
        %v594 = vadd.f32 %v586, %v591
        %v595 = vadd.f32 %v587, %v591
        %v596 = vadd.f32 %v588, %v591
        %v597 = vpack.c.bf16 %v594, %v593
        %v598 = vpack.c.bf16 %v596, %v595
        %v599 = vld [vmem:[#allocation7] sm:$0xff]
        %v600 = vld [vmem:[#allocation7 + $0x8] sm:$0xff]
        %v601 = vld [vmem:[#allocation7 + $0x10] sm:$0xff]
        %v602 = vld [vmem:[#allocation7 + $0x18] sm:$0xff]
        %v603 = vld [vmem:[#allocation7 + $0x20] sm:$0xff]
        %v604 = vld [vmem:[#allocation7 + $0x28] sm:$0xff]
        %v605 = vld [vmem:[#allocation7 + $0x30] sm:$0xff]
        %v606 = vld [vmem:[#allocation7 + $0x38] sm:$0xff]
        %v607 = vld [vmem:[#allocation7 + $0x40] sm:$0xff]
        %v608 = vld [vmem:[#allocation7 + $0x48] sm:$0xff]
        %v609 = vld [vmem:[#allocation7 + $0x50] sm:$0xff]
        %v610 = vld [vmem:[#allocation7 + $0x58] sm:$0xff]
        %v611 = vld [vmem:[#allocation7 + $0x60] sm:$0xff]
        %v612 = vld [vmem:[#allocation7 + $0x68] sm:$0xff]
        %v613 = vld [vmem:[#allocation7 + $0x70] sm:$0xff]
        %v614 = vld [vmem:[#allocation7 + $0x78] sm:$0xff]
        %v615 = vld [vmem:[%s4] sm:$0x3]
        %v617 = vperm.slane %v615, 0
        %v618 = vperm.slane %v615, 1
        %v637 = vunpack.c.l.b16 %v599
        %v638 = vunpack.c.h.b16 %v599
        %v639 = vunpack.c.l.b16 %v600
        %v640 = vunpack.c.h.b16 %v600
        %v641 = vunpack.c.l.b16 %v601
        %v642 = vunpack.c.h.b16 %v601
        %v643 = vunpack.c.l.b16 %v602
        %v644 = vunpack.c.h.b16 %v602
        %v645 = vunpack.c.l.b16 %v603
        %v646 = vunpack.c.h.b16 %v603
        %v647 = vunpack.c.l.b16 %v604
        %v648 = vunpack.c.h.b16 %v604
        %v649 = vunpack.c.l.b16 %v605
        %v650 = vunpack.c.h.b16 %v605
        %v651 = vunpack.c.l.b16 %v606
        %v652 = vunpack.c.h.b16 %v606
        %v653 = vunpack.c.l.b16 %v607
        %v654 = vunpack.c.h.b16 %v607
        %v655 = vunpack.c.l.b16 %v608
        %v656 = vunpack.c.h.b16 %v608
        %v657 = vunpack.c.l.b16 %v609
        %v658 = vunpack.c.h.b16 %v609
        %v659 = vunpack.c.l.b16 %v610
        %v660 = vunpack.c.h.b16 %v610
        %v661 = vunpack.c.l.b16 %v611
        %v662 = vunpack.c.h.b16 %v611
        %v663 = vunpack.c.l.b16 %v612
        %v664 = vunpack.c.h.b16 %v612
        %v665 = vunpack.c.l.b16 %v613
        %v666 = vunpack.c.h.b16 %v613
        %v667 = vunpack.c.l.b16 %v614
        %v668 = vunpack.c.h.b16 %v614
        %v669 = vpack.c.b16 %v639, %v637
        %v670 = vpack.c.b16 %v640, %v638
        %v671 = vpack.c.b16 %v643, %v641
        %v672 = vpack.c.b16 %v644, %v642
        %v673 = vpack.c.b16 %v647, %v645
        %v674 = vpack.c.b16 %v648, %v646
        %v675 = vpack.c.b16 %v651, %v649
        %v676 = vpack.c.b16 %v652, %v650
        %v677 = vpack.c.b16 %v655, %v653
        %v678 = vpack.c.b16 %v656, %v654
        %v679 = vpack.c.b16 %v659, %v657
        %v680 = vpack.c.b16 %v660, %v658
        %v681 = vpack.c.b16 %v663, %v661
        %v682 = vpack.c.b16 %v664, %v662
        %v683 = vpack.c.b16 %v667, %v665
        %v684 = vpack.c.b16 %v668, %v666
        %701 = vmatpush.bf16.msra.mxu0 %v683
        %702 = vmatpush.bf16.msra.mxu0 %v681
        %703 = vmatpush.bf16.msra.mxu0 %v679
        %704 = vmatpush.bf16.msra.mxu0 %v677
        %705 = vmatpush.bf16.msra.mxu0 %v675
        %706 = vmatpush.bf16.msra.mxu0 %v673
        %707 = vmatpush.bf16.msra.mxu0 %v671
        %708 = vmatpush.bf16.msra.mxu0 %v669
        %709 = vmatmul.bf16.gmra.mxu0 %v597
        %v710 = vpop.f32.mrf.mxu0
        %v711 = vadd.f32 %v617, %v710
        %v712 = vpop.f32.mrf.mxu0
        %v713 = vadd.f32 %v617, %v712
        %714 = vmatmul.bf16.gmra.mxu0 %v598
        %v715 = vpop.f32.mrf.mxu0
        %v716 = vadd.f32 %v617, %v715
        %v717 = vpop.f32.mrf.mxu0
        %v718 = vadd.f32 %v617, %v717
        %719 = vdwg.mxu0
        %720 = vmatpush.bf16.msra.mxu0 %v684
        %721 = vmatpush.bf16.msra.mxu0 %v682
        %722 = vmatpush.bf16.msra.mxu0 %v680
        %723 = vmatpush.bf16.msra.mxu0 %v678
        %724 = vmatpush.bf16.msra.mxu0 %v676
        %725 = vmatpush.bf16.msra.mxu0 %v674
        %726 = vmatpush.bf16.msra.mxu0 %v672
        %727 = vmatpush.bf16.msra.mxu0 %v670
        %728 = vmatmul.bf16.gmra.mxu0 %v597
        %v729 = vpop.f32.mrf.mxu0
        %v730 = vadd.f32 %v618, %v729
        %v731 = vpop.f32.mrf.mxu0
        %v732 = vadd.f32 %v618, %v731
        %733 = vmatmul.bf16.gmra.mxu0 %v598
        %v734 = vpop.f32.mrf.mxu0
        %v735 = vadd.f32 %v618, %v734
        %v736 = vpop.f32.mrf.mxu0
        %v737 = vadd.f32 %v618, %v736
        %738 = vdwg.mxu0
        %v739 = vxor.u32 %v730, 2147483648
        %v740 = vxor.u32 %v732, 2147483648
        %v741 = vxor.u32 %v735, 2147483648
        %v742 = vxor.u32 %v737, 2147483648
        %v743 = vmul.f32 %v739, 1.442695
        %v744 = vpow.pop %v743
        %v745 = vmul.f32 %v740, 1.442695
        %v746 = vpow.pop %v745
        %v747 = vmul.f32 %v741, 1.442695
        %v748 = vpow.pop %v747
        %v749 = vmul.f32 %v742, 1.442695
        %v750 = vpow.pop %v749
        %v751 = vadd.f32 %v744, 1.0
        %v752 = vadd.f32 %v746, 1.0
        %v753 = vadd.f32 %v748, 1.0
        %v754 = vadd.f32 %v750, 1.0
        %v755 = vrcp.pop %v751
        %v756 = vmul.f32 %v751, %v755
        %v757 = vsub.f32 1.0, %v756
        %v758 = vmul.f32 %v755, %v757
        %v759 = vadd.f32 %v755, %v758
        %vm760 = vweird.f32 %v751
        %vm761 = vweird.f32 %v755
        %vm762 = vmor %vm760, %vm761
        %v763 = vsel %vm762, %v755, %v759
        %v764 = vand.u32 2147483647, %v751
        %vm765 = vcmp.eq.f32.partialorder %v764, 8.507059e+37
        %v766 = vand.u32 %v751, 2147483648
        %v767 = vor.u32 1.1754944e-38, %v766
        %v768 = vsel %vm765, %v767, %v763
        %v769 = vmul.f32 1.0, %v768
        %v770 = vrcp.pop %v752
        %v771 = vmul.f32 %v752, %v770
        %v772 = vsub.f32 1.0, %v771
        %v773 = vmul.f32 %v770, %v772
        %v774 = vadd.f32 %v770, %v773
        %vm775 = vweird.f32 %v752
        %vm776 = vweird.f32 %v770
        %vm777 = vmor %vm775, %vm776
        %v778 = vsel %vm777, %v770, %v774
        %v779 = vand.u32 2147483647, %v752
        %vm780 = vcmp.eq.f32.partialorder %v779, 8.507059e+37
        %v781 = vand.u32 %v752, 2147483648
        %v782 = vor.u32 1.1754944e-38, %v781
        %v783 = vsel %vm780, %v782, %v778
        %v784 = vmul.f32 1.0, %v783
        %v785 = vrcp.pop %v753
        %v786 = vmul.f32 %v753, %v785
        %v787 = vsub.f32 1.0, %v786
        %v788 = vmul.f32 %v785, %v787
        %v789 = vadd.f32 %v785, %v788
        %vm790 = vweird.f32 %v753
        %vm791 = vweird.f32 %v785
        %vm792 = vmor %vm790, %vm791
        %v793 = vsel %vm792, %v785, %v789
        %v794 = vand.u32 2147483647, %v753
        %vm795 = vcmp.eq.f32.partialorder %v794, 8.507059e+37
        %v796 = vand.u32 %v753, 2147483648
        %v797 = vor.u32 1.1754944e-38, %v796
        %v798 = vsel %vm795, %v797, %v793
        %v799 = vmul.f32 1.0, %v798
        %v800 = vrcp.pop %v754
        %v801 = vmul.f32 %v754, %v800
        %v802 = vsub.f32 1.0, %v801
        %v803 = vmul.f32 %v800, %v802
        %v804 = vadd.f32 %v800, %v803
        %vm805 = vweird.f32 %v754
        %vm806 = vweird.f32 %v800
        %vm807 = vmor %vm805, %vm806
        %v808 = vsel %vm807, %v800, %v804
        %v809 = vand.u32 2147483647, %v754
        %vm810 = vcmp.eq.f32.partialorder %v809, 8.507059e+37
        %v811 = vand.u32 %v754, 2147483648
        %v812 = vor.u32 1.1754944e-38, %v811
        %v813 = vsel %vm810, %v812, %v808
        %v814 = vmul.f32 1.0, %v813
        %v815 = vmul.f32 %v711, %v769
        %v816 = vmul.f32 %v713, %v784
        %v817 = vmul.f32 %v716, %v799
        %v818 = vmul.f32 %v718, %v814
        %s819 = smul.u32 %s35, 16
        %s820 = ssub.s32 %s819, 8
        %v821 = vlaneseq
        %v822 = vshrl.u32 %v821, 7
        %v823 = vadd.s32 %v822, 8
        %v824 = vadd.s32 %v822, 16
        %v825 = vadd.s32 %v822, 24
        %v826 = vstv %s820
        %v827 = vadd.s32 %v826, %v822
        %v828 = vadd.s32 %v826, %v823
        %v829 = vadd.s32 %v826, %v824
        %v830 = vadd.s32 %v826, %v825
        %vm831 = vcmp.ge.s32.totalorder %v827, 0
        %vm832 = vcmp.ge.s32.totalorder %v828, 0
        %vm833 = vcmp.ge.s32.totalorder %v829, 0
        %vm834 = vcmp.ge.s32.totalorder %v830, 0
        %vm835 = vcmp.lt.s32.totalorder %v827, 16
        %vm836 = vcmp.lt.s32.totalorder %v828, 16
        %vm837 = vcmp.lt.s32.totalorder %v829, 16
        %vm838 = vcmp.lt.s32.totalorder %v830, 16
        %vm839 = vmand %vm831, %vm835
        %vm840 = vmand %vm832, %vm836
        %vm841 = vmand %vm833, %vm837
        %vm842 = vmand %vm834, %vm838
        %v843 = vsel %vm839, 1, 0
        %v844 = vsel %vm840, 1, 0
        %v845 = vsel %vm841, 1, 0
        %v846 = vsel %vm842, 1, 0
        %vm847 = vcmp.eq.s32.totalorder %v843, 1
        %vm848 = vcmp.eq.s32.totalorder %v844, 1
        %vm849 = vcmp.eq.s32.totalorder %v845, 1
        %vm850 = vcmp.eq.s32.totalorder %v846, 1
        %v851 = vsel %vm847, %v815, 0.0
        %v852 = vsel %vm848, %v816, 0.0
        %v853 = vsel %vm849, %v817, 0.0
        %v854 = vsel %vm850, %v818, 0.0
        %v855 = vrot.slane %v851, 5
        %v856 = vrot.slane %v852, 5
        %v857 = vrot.slane %v853, 5
        %v858 = vrot.slane %v854, 5
        %vm859 = vcmp.lt.s32.totalorder %v822, 3
        %v860 = vsel %vm859, %v857, %v858
        %v861 = vsel %vm859, %v856, %v857
        %v862 = vsel %vm859, %v855, %v856
        %v863 = vsel %vm859, %v858, %v855
        %v864 = vld [vmem:[#allocation8] sm:$0x7f]
        %v865 = vperm.slane %v864, 0
        %v866 = vmul.f32 %v862, %v865
        %v867 = vmul.f32 %v861, %v865
        %v868 = vadd.f32 %v866, 0.0
        %v869 = vadd.f32 %v867, 0.0
        %v870 = vrot.slane %v862, 1
        %v871 = vrot.slane %v861, 1
        %v872 = vrot.slane %v860, 1
        %v873 = vrot.slane %v863, 1
        %vm874 = vcmp.lt.s32.totalorder %v822, 7
        %v875 = vsel %vm874, %v872, %v873
        %v876 = vsel %vm874, %v871, %v872
        %v877 = vsel %vm874, %v870, %v871
        %v878 = vsel %vm874, %v873, %v870
        %v879 = vperm.slane %v864, 1
        %v880 = vmul.f32 %v877, %v879
        %v881 = vmul.f32 %v876, %v879
        %v882 = vadd.f32 %v868, %v880
        %v883 = vadd.f32 %v869, %v881
        %v884 = vrot.slane %v877, 1
        %v885 = vrot.slane %v876, 1
        %v886 = vrot.slane %v875, 1
        %v887 = vrot.slane %v878, 1
        %v888 = vsel %vm874, %v886, %v887
        %v889 = vsel %vm874, %v885, %v886
        %v890 = vsel %vm874, %v884, %v885
        %v891 = vsel %vm874, %v887, %v884
        %v892 = vperm.slane %v864, 2
        %v893 = vmul.f32 %v890, %v892
        %v894 = vmul.f32 %v889, %v892
        %v895 = vadd.f32 %v882, %v893
        %v896 = vadd.f32 %v883, %v894
        %v897 = vrot.slane %v890, 1
        %v898 = vrot.slane %v889, 1
        %v899 = vrot.slane %v888, 1
        %v900 = vrot.slane %v891, 1
        %v901 = vsel %vm874, %v899, %v900
        %v902 = vsel %vm874, %v898, %v899
        %v903 = vsel %vm874, %v897, %v898
        %v904 = vsel %vm874, %v900, %v897
        %v905 = vperm.slane %v864, 3
        %v906 = vmul.f32 %v903, %v905
        %v907 = vmul.f32 %v902, %v905
        %v908 = vadd.f32 %v895, %v906
        %v909 = vadd.f32 %v896, %v907
        %v910 = vrot.slane %v903, 1
        %v911 = vrot.slane %v902, 1
        %v912 = vrot.slane %v901, 1
        %v913 = vrot.slane %v904, 1
        %v914 = vsel %vm874, %v912, %v913
        %v915 = vsel %vm874, %v911, %v912
        %v916 = vsel %vm874, %v910, %v911
        %v917 = vsel %vm874, %v913, %v910
        %v918 = vperm.slane %v864, 4
        %v919 = vmul.f32 %v916, %v918
        %v920 = vmul.f32 %v915, %v918
        %v921 = vadd.f32 %v908, %v919
        %v922 = vadd.f32 %v909, %v920
        %v923 = vrot.slane %v916, 1
        %v924 = vrot.slane %v915, 1
        %v925 = vrot.slane %v914, 1
        %v926 = vrot.slane %v917, 1
        %v927 = vsel %vm874, %v925, %v926
        %v928 = vsel %vm874, %v924, %v925
        %v929 = vsel %vm874, %v923, %v924
        %v930 = vperm.slane %v864, 5
        %v931 = vmul.f32 %v929, %v930
        %v932 = vmul.f32 %v928, %v930
        %v933 = vadd.f32 %v921, %v931
        %v934 = vadd.f32 %v922, %v932
        %v935 = vrot.slane %v929, 1
        %v936 = vrot.slane %v928, 1
        %v937 = vrot.slane %v927, 1
        %v938 = vsel %vm874, %v936, %v937
        %v939 = vsel %vm874, %v935, %v936
        %v940 = vperm.slane %v864, 6
        %v941 = vmul.f32 %v939, %v940
        %v942 = vmul.f32 %v938, %v940
        %v943 = vadd.f32 %v933, %v941
        %v944 = vadd.f32 %v934, %v942
        %v945 = vld [vmem:[%s6] sm:$0x1]
        %v947 = vperm.slane %v945, 0
        %v949 = vadd.f32 %v943, %v947
        %v950 = vadd.f32 %v944, %v947
        %v951 = vld [vmem:[%s7] sm:$0x1]
        %v953 = vperm.slane %v951, 0
        %v955 = vmul.f32 %v949, %v953
        %v956 = vmul.f32 %v950, %v953
        %v957 = vld [vmem:[%s8] sm:$0x1]
        %v959 = vperm.slane %v957, 0
        %v961 = vadd.f32 %v955, %v959
        %v962 = vadd.f32 %v956, %v959
        %v963 = vxor.u32 %v961, 2147483648
        %v964 = vxor.u32 %v962, 2147483648
        %v965 = vmul.f32 %v963, 1.442695
        %v966 = vpow.pop %v965
        %v967 = vmul.f32 %v964, 1.442695
        %v968 = vpow.pop %v967
        %v969 = vadd.f32 %v966, 1.0
        %v970 = vadd.f32 %v968, 1.0
        %v971 = vrcp.pop %v969
        %v972 = vmul.f32 %v969, %v971
        %v973 = vsub.f32 1.0, %v972
        %v974 = vmul.f32 %v971, %v973
        %v975 = vadd.f32 %v971, %v974
        %vm976 = vweird.f32 %v969
        %vm977 = vweird.f32 %v971
        %vm978 = vmor %vm976, %vm977
        %v979 = vsel %vm978, %v971, %v975
        %v980 = vand.u32 2147483647, %v969
        %vm981 = vcmp.eq.f32.partialorder %v980, 8.507059e+37
        %v982 = vand.u32 %v969, 2147483648
        %v983 = vor.u32 1.1754944e-38, %v982
        %v984 = vsel %vm981, %v983, %v979
        %v985 = vmul.f32 1.0, %v984
        %v986 = vrcp.pop %v970
        %v987 = vmul.f32 %v970, %v986
        %v988 = vsub.f32 1.0, %v987
        %v989 = vmul.f32 %v986, %v988
        %v990 = vadd.f32 %v986, %v989
        %vm991 = vweird.f32 %v970
        %vm992 = vweird.f32 %v986
        %vm993 = vmor %vm991, %vm992
        %v994 = vsel %vm993, %v986, %v990
        %v995 = vand.u32 2147483647, %v970
        %vm996 = vcmp.eq.f32.partialorder %v995, 8.507059e+37
        %v997 = vand.u32 %v970, 2147483648
        %v998 = vor.u32 1.1754944e-38, %v997
        %v999 = vsel %vm996, %v998, %v994
        %v1000 = vmul.f32 1.0, %v999
        %v1001 = vmul.f32 %v961, %v985
        %v1002 = vmul.f32 %v962, %v1000
        %v1003 = vpack.c.bf16 %v1002, %v1001
        %v1004 = vld [vmem:[#allocation10] sm:$0xf]
        %v1005 = vld [vmem:[#allocation10 + $0x4] sm:$0xf]
        %v1006 = vld [vmem:[#allocation10 + $0x8] sm:$0xf]
        %v1007 = vld [vmem:[#allocation10 + $0xc] sm:$0xf]
        %v1008 = vld [vmem:[#allocation10 + $0x10] sm:$0xf]
        %v1009 = vld [vmem:[#allocation10 + $0x14] sm:$0xf]
        %v1010 = vld [vmem:[#allocation10 + $0x18] sm:$0xf]
        %v1011 = vld [vmem:[#allocation10 + $0x1c] sm:$0xf]
        %v1012 = vld [vmem:[#allocation10 + $0x20] sm:$0xf]
        %v1013 = vld [vmem:[#allocation10 + $0x24] sm:$0xf]
        %v1014 = vld [vmem:[#allocation10 + $0x28] sm:$0xf]
        %v1015 = vld [vmem:[#allocation10 + $0x2c] sm:$0xf]
        %v1016 = vld [vmem:[#allocation10 + $0x30] sm:$0xf]
        %v1017 = vld [vmem:[#allocation10 + $0x34] sm:$0xf]
        %v1018 = vld [vmem:[#allocation10 + $0x38] sm:$0xf]
        %v1019 = vld [vmem:[#allocation10 + $0x3c] sm:$0xf]
        %v1020 = vld [vmem:[%s10] sm:$0x1]
        %v1022 = vperm.slane %v1020, 0
        %v1040 = vunpack.c.l.b16 %v1004
        %v1041 = vunpack.c.l.b16 %v1005
        %v1042 = vunpack.c.l.b16 %v1006
        %v1043 = vunpack.c.l.b16 %v1007
        %v1044 = vunpack.c.l.b16 %v1008
        %v1045 = vunpack.c.l.b16 %v1009
        %v1046 = vunpack.c.l.b16 %v1010
        %v1047 = vunpack.c.l.b16 %v1011
        %v1048 = vunpack.c.l.b16 %v1012
        %v1049 = vunpack.c.l.b16 %v1013
        %v1050 = vunpack.c.l.b16 %v1014
        %v1051 = vunpack.c.l.b16 %v1015
        %v1052 = vunpack.c.l.b16 %v1016
        %v1053 = vunpack.c.l.b16 %v1017
        %v1054 = vunpack.c.l.b16 %v1018
        %v1055 = vunpack.c.l.b16 %v1019
        %v1056 = vpack.c.b16 %v1041, %v1040
        %v1057 = vpack.c.b16 %v1043, %v1042
        %v1058 = vpack.c.b16 %v1045, %v1044
        %v1059 = vpack.c.b16 %v1047, %v1046
        %v1060 = vpack.c.b16 %v1049, %v1048
        %v1061 = vpack.c.b16 %v1051, %v1050
        %v1062 = vpack.c.b16 %v1053, %v1052
        %v1063 = vpack.c.b16 %v1055, %v1054
        %1072 = vmatpush.bf16.msra.mxu0 %v1063
        %1073 = vmatpush.bf16.msra.mxu0 %v1062
        %1074 = vmatpush.bf16.msra.mxu0 %v1061
        %1075 = vmatpush.bf16.msra.mxu0 %v1060
        %1076 = vmatpush.bf16.msra.mxu0 %v1059
        %1077 = vmatpush.bf16.msra.mxu0 %v1058
        %1078 = vmatpush.bf16.msra.mxu0 %v1057
        %1079 = vmatpush.bf16.msra.mxu0 %v1056
        %1080 = vmatmul.bf16.gmra.mxu0 %v1003
        %v1081 = vpop.f32.mrf.mxu0
        %v1082 = vadd.f32 %v1022, %v1081
        %v1083 = vpop.f32.mrf.mxu0
        %v1084 = vadd.f32 %v1022, %v1083
        %1085 = vdwg.mxu0
        %1086 = vst [vmem:[%s486] sm:$0xff] %v1082
        %1087 = vst [vmem:[%s486 + $0x8] sm:$0xff] %v1084
        %s1088 = sand.u32 %s290, 1
        %s1089 = scalar_lea.sflag [#allocation4], %s1088
        %s1090 = sand.u32 %s290, 1
        %s1091 = smul.addr %s1090, 16
        %s1092 = scalar_lea.vmem [#allocation11], %s1091
        // Predicated region
        $region85: #{tpu_custom_call.1} parent=63 // pred_check
          %p1093 = pneg %p300
        $region86: #{tpu_custom_call.1} parent=63 // pred_check_branch
          %1095 = sbr.rel (%p1093) target = $region88
        $region87: #{tpu_custom_call.1} parent=63 // pred_region
          %s1096 = smul.u32 2, %s35
          %1098 = vsyncadd %s1089, 0
          %s1099 = smul.addr %s34, 2
          %s1100 = sadd.s32 %s1096, %s1099
          %s1101 = smul.addr %s1100, 8
          %s1102 = scalar_lea.hbm %s11, %s1101
          %s1103 = sshll.u32 %s1092, 4
          %s1104 = int_to_ptr.vmem [resolvable:$true] %s1103
          %s1105 = sshll.u32 %s1102, 4
          %s1106 = int_to_ptr.hbm [resolvable:$true] %s1105
          %1111 = dma.vmem_to_hbm [thread:$0]  %s1104, 256, %s1106, %s1089, 128, 128, 8
        $region88: #{tpu_custom_call.1} parent=63 // pred_fallthru
          _
      $region64: #{tpu_custom_call.1} parent=5 // pred_fallthru
        _
      %p1112 = scmp.le.s32.totalorder 2, %s25
      // Predicated region
      $region89: #{tpu_custom_call.1} parent=5 // pred_check
        %p1113 = pneg %p1112
      $region90: #{tpu_custom_call.1} parent=5 // pred_check_branch
        %1115 = sbr.rel (%p1113) target = $region92
      $region91: #{tpu_custom_call.1} parent=5 // pred_region
        %s1116 = ssub.s32 %s25, 2
        // Predicated region
        $region93: #{tpu_custom_call.1} parent=91 // pred_check
          %p1117 = pneg %p306
        $region94: #{tpu_custom_call.1} parent=91 // pred_check_branch
          %1119 = sbr.rel (%p1117) target = $region96
        $region95: #{tpu_custom_call.1} parent=91 // pred_region
          %s1120 = sand.u32 %s291, 1
          %s1121 = scalar_lea.sflag [#allocation4], %s1120
          %s1122 = sand.u32 %s291, 1
          %s1123 = smul.addr %s1122, 16
          %s1124 = scalar_lea.vmem [#allocation11], %s1123
          %1126 = dma.done %s1121, 256
        $region96: #{tpu_custom_call.1} parent=91 // pred_fallthru
          _
      $region92: #{tpu_custom_call.1} parent=5 // pred_fallthru
        _
    $region6: #{tpu_custom_call.1} parent=1 // loop_footer
      %s29 = sadd.s32 1, %s25
    $region7: #{tpu_custom_call.1} parent=1 // loop_footer_branch
      %24 = sbr.rel target = $region3
    $region8: #{tpu_custom_call.1} parent=1 // loop_exit
      _
    %1127 = vsyncpa [#allocation3], 1
    %s1128 = scalar_lea.sflag [#allocation3], 1
    %1129 = vsyncpa %s1128, 1
    %1130 = vsyncpa [#allocation6], 1
    %1131 = vsyncpa [#allocation9], 1
    %1132 = vsyncpa [#allocation4], 1
    %s1133 = scalar_lea.sflag [#allocation4], 1
    %1134 = vsyncpa %s1133, 1

</llo_original>
